<compile_context>
chip_gen: v5e
topology: v5e:2x2
jax: 0.10.0
libtpu: 0.0.40
codegen_flags: <defaults>
</compile_context>

<pallas_src>
import functools

import jax
import jax.numpy as jnp
from jax import lax
from jax.experimental import pallas as pl
from jax.experimental.pallas import tpu as pltpu


def _halo_guard(W):
    # Zero guard band (lanes) on each side of the flattened-HW interior.
    # Must be >= W+1 (one padded row plus one pixel); keep it 128-aligned so
    # the interior store stays aligned and unmasked.
    return ((W + 1 + 127) // 128) * 128


# ----------------------------------------------------------------------------
# Fused ResidualGroup kernel
# ----------------------------------------------------------------------------
def _make_group_kernel(H, W, C, n_resblocks):
    L = 2 * n_resblocks + 1          # total conv layers in the group
    HW = H * W
    G = _halo_guard(W)

    def kernel(x_ref, w_ref, b_ref, out_ref, buf_ref, res_ref):
        # buf_ref: (C, G + HW + G) bf16 -- activation with zero guard bands.
        #          interior buf[:, G + i*W + j] = act[:, i, j]; reading the
        #          guards gives the H-border zero padding for free.
        # res_ref: (C, HW) f32 -- running ResBlock residual (kept in f32).

        # Zero only the guard bands (tiny, aligned); the interior is always
        # overwritten.  Done every grid step so megacore sharding stays safe.
        buf_ref[:, :G] = jnp.zeros((C, G), jnp.bfloat16)
        buf_ref[:, G + HW:] = jnp.zeros((C, G), jnp.bfloat16)

        buf_ref[:, G:G + HW] = x_ref[0].astype(jnp.bfloat16)
        res_ref[...] = x_ref[0]

        # Lane masks for the W-border (left/right taps wrap across rows in the
        # flattened layout; those lanes must contribute zero).
        col = lax.broadcasted_iota(jnp.int32, (C, HW), 1) % W
        keep_l = col != 0          # valid lanes for kx = 0 (reads column j-1)
        keep_r = col != (W - 1)    # valid lanes for kx = 2 (reads column j+1)
        zero_bf = jnp.zeros((C, HW), jnp.bfloat16)

        def conv(w_taps, bias, relu):
            # w_taps: (9, C, C) bf16   (w_taps[t, co, ci])
            # bias  : (C, 1) f32
            # 9 accumulating MXU dots, f32 accumulation; output (C, HW) is
            # lane-dense (HW on lanes).
            acc = jnp.zeros((C, HW), jnp.float32)
            for ky in range(3):
                for kx in range(3):
                    t = ky * 3 + kx
                    s = (ky - 1) * W + (kx - 1)
                    tap = buf_ref[:, G + s:G + s + HW]        # (C, HW) bf16
                    if kx == 0:
                        tap = jnp.where(keep_l, tap, zero_bf)
                    elif kx == 2:
                        tap = jnp.where(keep_r, tap, zero_bf)
                    acc = acc + jnp.dot(w_taps[t], tap,
                                        preferred_element_type=jnp.float32)
            acc = acc + bias
            if relu:
                acc = jnp.maximum(acc, 0.0)
            return acc                                         # (C, HW) f32

        def block_body(rb, carry):
            # ResB: res = 0.1 * conv2(relu(conv1(res))) + res
            # (the 0.1 is pre-folded into conv2's weights/bias)
            h = conv(w_ref[2 * rb], b_ref[2 * rb], relu=True)
            buf_ref[:, G:G + HW] = h.astype(jnp.bfloat16)
            res = conv(w_ref[2 * rb + 1], b_ref[2 * rb + 1],
                       relu=False) + res_ref[...]
            res_ref[...] = res
            buf_ref[:, G:G + HW] = res.astype(jnp.bfloat16)
            return carry

        lax.fori_loop(0, n_resblocks, block_body, 0)

        # Tail conv + group skip: out = conv(res) + x
        out = conv(w_ref[L - 1], b_ref[L - 1], relu=False) + x_ref[0]
        out_ref[0] = out.astype(out_ref.dtype)

    return kernel


def _prepare_group_weights(params, C):
    """Stack all conv weights as (L, 9, C_out, C_in) bf16 (0.1 folded into
    conv2) and biases as (L, C, 1) f32."""

    def to_taps(w):  # (3, 3, C_in, C_out) HWIO -> (9, C_out, C_in)
        return jnp.transpose(w, (0, 1, 3, 2)).reshape(9, C, C)

    ws, bs = [], []
    for (w1, b1, w2, b2) in params["blocks"]:
        ws.append(to_taps(w1))
        bs.append(b1)
        ws.append(to_taps(0.1 * w2))          # fold ResB 0.1 scale
        bs.append(0.1 * b2)
    ws.append(to_taps(params["wf"]))
    bs.append(params["bf"])
    w_all = jnp.stack(ws, axis=0).astype(jnp.bfloat16)              # (L,9,C,C)
    b_all = jnp.stack(bs, axis=0).astype(jnp.float32)[:, :, None]   # (L,C,1)
    return w_all, b_all


def residual_group_forward(x_nchw, params):
    """Fused ResidualGroup forward: n_resblocks x ResB, tail conv3x3, skip."""
    N, C, H, W = x_nchw.shape
    HW = H * W
    # Lane/sublane tiling of the (C, HW) I/O blocks.
    assert C % 8 == 0 and HW % 128 == 0, "need C % 8 == 0 and H*W % 128 == 0"
    n_resblocks = len(params["blocks"])
    L = 2 * n_resblocks + 1
    G = _halo_guard(W)

    w_all, b_all = _prepare_group_weights(params, C)
    kernel = _make_group_kernel(H, W, C, n_resblocks)

    x_flat = x_nchw.reshape(N, C, HW)   # native NCHW, just flatten HW to lanes
    out = pl.pallas_call(
        kernel,
        out_shape=jax.ShapeDtypeStruct((N, C, HW), x_nchw.dtype),
        grid=(N,),
        in_specs=[
            pl.BlockSpec((1, C, HW), lambda n: (n, 0, 0)),          # x
            pl.BlockSpec((L, 9, C, C), lambda n: (0, 0, 0, 0)),     # weights
            pl.BlockSpec((L, C, 1), lambda n: (0, 0, 0)),           # biases
        ],
        out_specs=pl.BlockSpec((1, C, HW), lambda n: (n, 0, 0)),
        scratch_shapes=[
            pltpu.VMEM((C, G + HW + G), jnp.bfloat16),   # guarded activation
            pltpu.VMEM((C, HW), jnp.float32),            # f32 ResB residual
        ],
        compiler_params=pltpu.CompilerParams(
            dimension_semantics=("parallel",),
        ),
    )(x_flat, w_all, b_all)
    return out.reshape(N, C, H, W)


# ----------------------------------------------------------------------------
# Pure-JAX f32 reference (correctness check only)
# ----------------------------------------------------------------------------
def _conv3x3_ref(x_nchw, w_hwio, b):
    y = lax.conv_general_dilated(
        x_nchw, w_hwio, window_strides=(1, 1), padding="SAME",
        dimension_numbers=("NCHW", "HWIO", "NCHW"),
    )
    return y + b.reshape(1, -1, 1, 1)


def residual_group_ref(x, params):
    res = x
    for (w1, b1, w2, b2) in params["blocks"]:
        h = jnp.maximum(_conv3x3_ref(res, w1, b1), 0.0)
        res = 0.1 * _conv3x3_ref(h, w2, b2) + res
    return _conv3x3_ref(res, params["wf"], params["bf"]) + x


# ----------------------------------------------------------------------------
# Deterministic parameter init (PyTorch Conv2d default-ish uniform bounds)
# ----------------------------------------------------------------------------
def init_params(key, n_feat, n_resblocks):
    bound = 1.0 / jnp.sqrt(jnp.float32(n_feat * 9))

    def conv_init(k):
        kw, kb = jax.random.split(k)
        w = jax.random.uniform(kw, (3, 3, n_feat, n_feat), jnp.float32,
                               -bound, bound)
        b = jax.random.uniform(kb, (n_feat,), jnp.float32, -bound, bound)
        return w, b

    blocks = []
    for _ in range(n_resblocks):
        key, k1, k2 = jax.random.split(key, 3)
        w1, b1 = conv_init(k1)
        w2, b2 = conv_init(k2)
        blocks.append((w1, b1, w2, b2))
    key, kf = jax.random.split(key)
    wf, bf = conv_init(kf)
    return {"blocks": blocks, "wf": wf, "bf": bf}


if __name__ == "__main__":
    N, C, H, W = 2, 8, 16, 16
    n_resblocks = 2

    key = jax.random.PRNGKey(0)
    key, kx = jax.random.split(key)
    x_nchw = jax.random.normal(kx, (N, C, H, W), jnp.float32)  # PyTorch layout
    params = init_params(key, n_feat=C, n_resblocks=n_resblocks)

    fwd = jax.jit(functools.partial(residual_group_forward, params=params))
    out_nchw = fwd(x_nchw)
    jax.block_until_ready(out_nchw)

    # Correctness check against a pure-JAX f32 reference (kernel uses bf16 MXU
    # inputs with f32 accumulation, so tolerance is bf16-scale).
    ref_nchw = residual_group_ref(x_nchw, params)
    assert out_nchw.shape == (N, C, H, W)
    assert jnp.allclose(out_nchw, ref_nchw, atol=5e-2, rtol=5e-2)

    print("KERNEL_OK")
</pallas_src>

<mosaic_0001>
module attributes {stable_mosaic.version = 11 : i64} {
  func.func @kernel(%arg0: i32, %arg1: memref<1x8x256xf32, #tpu.memory_space<vmem>>, %arg2: memref<5x9x8x8xbf16, #tpu.memory_space<vmem>>, %arg3: memref<5x8x1xf32, #tpu.memory_space<vmem>>, %arg4: memref<1x8x256xf32, #tpu.memory_space<vmem>>, %arg5: memref<8x512xbf16, #tpu.memory_space<vmem>>, %arg6: memref<8x256xf32, #tpu.memory_space<vmem>>) attributes {dimension_semantics = [#tpu.dimension_semantics<parallel>], iteration_bounds = array<i64: 2>, scalar_prefetch = 0 : i64, scratch_operands = 2 : i64, tpu.core_type = #tpu.core_type<tc>, window_params = [{transform_indices = @transform_0, window_bounds = array<i64: 1, 8, 256>}, {pipeline_mode = #tpu.pipeline_mode<synchronous>, transform_indices = @transform_1, window_bounds = array<i64: 5, 9, 8, 8>}, {pipeline_mode = #tpu.pipeline_mode<synchronous>, transform_indices = @transform_2, window_bounds = array<i64: 5, 8, 1>}, {transform_indices = @transform_3, window_bounds = array<i64: 1, 8, 256>}]} {
    %cst = arith.constant 0.000000e+00 : bf16
    %0 = vector.broadcast %cst : bf16 to vector<8x128xbf16>
    %c0 = arith.constant 0 : index
    %c0_0 = arith.constant 0 : index
    %1 = vector.load %arg5[%c0, %c0_0] : memref<8x512xbf16, #tpu.memory_space<vmem>>, vector<8x128xbf16>
    tpu.vector_store %arg5[%c0, %c0_0], %0 {strides = array<i32>} : memref<8x512xbf16, #tpu.memory_space<vmem>>, vector<8x128xbf16>,
    %cst_1 = arith.constant 0.000000e+00 : bf16
    %2 = vector.broadcast %cst_1 : bf16 to vector<8x128xbf16>
    %c0_2 = arith.constant 0 : index
    %c384 = arith.constant 384 : index
    %3 = vector.load %arg5[%c0_2, %c384] : memref<8x512xbf16, #tpu.memory_space<vmem>>, vector<8x128xbf16>
    tpu.vector_store %arg5[%c0_2, %c384], %2 {strides = array<i32>} : memref<8x512xbf16, #tpu.memory_space<vmem>>, vector<8x128xbf16>,
    %c0_3 = arith.constant 0 : index
    %c0_4 = arith.constant 0 : index
    %c0_5 = arith.constant 0 : index
    %4 = vector.load %arg1[%c0_3, %c0_4, %c0_5] : memref<1x8x256xf32, #tpu.memory_space<vmem>>, vector<1x8x256xf32>
    %5 = vector.shape_cast %4 : vector<1x8x256xf32> to vector<8x256xf32>
    %6 = arith.truncf %5 : vector<8x256xf32> to vector<8x256xbf16>
    %c0_6 = arith.constant 0 : index
    %c128 = arith.constant 128 : index
    %7 = vector.load %arg5[%c0_6, %c128] : memref<8x512xbf16, #tpu.memory_space<vmem>>, vector<8x256xbf16>
    tpu.vector_store %arg5[%c0_6, %c128], %6 {strides = array<i32>} : memref<8x512xbf16, #tpu.memory_space<vmem>>, vector<8x256xbf16>,
    %c0_7 = arith.constant 0 : index
    %c0_8 = arith.constant 0 : index
    %c0_9 = arith.constant 0 : index
    %8 = vector.load %arg1[%c0_7, %c0_8, %c0_9] : memref<1x8x256xf32, #tpu.memory_space<vmem>>, vector<1x8x256xf32>
    %9 = vector.shape_cast %8 : vector<1x8x256xf32> to vector<8x256xf32>
    %c0_10 = arith.constant 0 : index
    %c0_11 = arith.constant 0 : index
    %10 = vector.load %arg6[%c0_10, %c0_11] : memref<8x256xf32, #tpu.memory_space<vmem>>, vector<8x256xf32>
    tpu.vector_store %arg6[%c0_10, %c0_11], %9 {strides = array<i32>} : memref<8x256xf32, #tpu.memory_space<vmem>>, vector<8x256xf32>,
    %11 = tpu.iota {dimensions = array<i32: 1>} : vector<8x256xi32>
    %c16_i32 = arith.constant 16 : i32
    %c0_i32 = arith.constant 0 : i32
    %12 = arith.cmpi eq, %c16_i32, %c0_i32 : i32
    %c1_i32 = arith.constant 1 : i32
    %13 = arith.select %12, %c1_i32, %c16_i32 : i32
    %14 = vector.broadcast %13 : i32 to vector<8x256xi32>
    %15 = arith.remsi %11, %14 : vector<8x256xi32>
    %c0_i32_12 = arith.constant 0 : i32
    %16 = vector.broadcast %c0_i32_12 : i32 to vector<8x256xi32>
    %17 = arith.cmpi ne, %15, %16 : vector<8x256xi32>
    %c0_i32_13 = arith.constant 0 : i32
    %18 = vector.broadcast %c0_i32_13 : i32 to vector<8x256xi32>
    %19 = arith.cmpi slt, %15, %18 : vector<8x256xi32>
    %c0_i32_14 = arith.constant 0 : i32
    %20 = arith.cmpi slt, %13, %c0_i32_14 : i32
    %21 = vector.broadcast %20 : i1 to vector<8x256xi1>
    %22 = vector.broadcast %21 : vector<8x256xi1> to vector<8x256xi1>
    %23 = arith.xori %19, %22 : vector<8x256xi1>
    %24 = arith.andi %23, %17 : vector<8x256xi1>
    %25 = vector.broadcast %13 : i32 to vector<8x256xi32>
    %26 = arith.addi %15, %25 : vector<8x256xi32>
    %27 = arith.select %24, %26, %15 : vector<8x256xi1>, vector<8x256xi32>
    %c0_i32_15 = arith.constant 0 : i32
    %28 = vector.broadcast %c0_i32_15 : i32 to vector<8x256xi32>
    %29 = arith.cmpi ne, %27, %28 : vector<8x256xi32>
    %c15_i32 = arith.constant 15 : i32
    %30 = vector.broadcast %c15_i32 : i32 to vector<8x256xi32>
    %31 = arith.cmpi ne, %27, %30 : vector<8x256xi32>
    %cst_16 = arith.constant 0.000000e+00 : bf16
    %32 = vector.broadcast %cst_16 : bf16 to vector<8x256xbf16>
    %c0_i32_17 = arith.constant 0 : i32
    %c2_i32 = arith.constant 2 : i32
    %33 = arith.addi %c0_i32_17, %c2_i32 : i32
    %c1_i32_18 = arith.constant 1 : i32
    scf.for %arg7 = %c0_i32_17 to %33 step %c1_i32_18  : i32 {
      %c2_i32_52 = arith.constant 2 : i32
      %98 = arith.muli %c2_i32_52, %arg7 : i32
      %99 = arith.index_cast %98 : i32 to index
      %c0_53 = arith.constant 0 : index
      %c0_54 = arith.constant 0 : index
      %c0_55 = arith.constant 0 : index
      %100 = vector.load %arg2[%99, %c0_53, %c0_54, %c0_55] : memref<5x9x8x8xbf16, #tpu.memory_space<vmem>>, vector<1x9x8x8xbf16>
      %101 = vector.shape_cast %100 : vector<1x9x8x8xbf16> to vector<9x8x8xbf16>
      %c2_i32_56 = arith.constant 2 : i32
      %102 = arith.muli %c2_i32_56, %arg7 : i32
      %103 = arith.index_cast %102 : i32 to index
      %c0_57 = arith.constant 0 : index
      %c0_58 = arith.constant 0 : index
      %104 = vector.load %arg3[%103, %c0_57, %c0_58] : memref<5x8x1xf32, #tpu.memory_space<vmem>>, vector<1x8x1xf32>
      %105 = vector.shape_cast %104 : vector<1x8x1xf32> to vector<8x1xf32>
      %cst_59 = arith.constant 0.000000e+00 : f32
      %106 = vector.broadcast %cst_59 : f32 to vector<8x256xf32>
      %c0_60 = arith.constant 0 : index
      %c111_61 = arith.constant 111 : index
      %107 = vector.load %arg5[%c0_60, %c111_61] : memref<8x512xbf16, #tpu.memory_space<vmem>>, vector<8x256xbf16>
      %108 = arith.select %29, %107, %32 : vector<8x256xi1>, vector<8x256xbf16>
      %109 = vector.extract_strided_slice %101 {offsets = [0, 0, 0], sizes = [1, 8, 8], strides = [1, 1, 1]} : vector<9x8x8xbf16> to vector<1x8x8xbf16>
      %110 = vector.shape_cast %109 : vector<1x8x8xbf16> to vector<8x8xbf16>
      %cst_62 = arith.constant dense<0.000000e+00> : vector<8x256xf32>
      %111 = tpu.matmul %110, %108, %cst_62 {dimension_numbers = #tpu.dot_dimension_numbers<[1], [0], [0], [1], [0, 0, 1, 1], [], []>} : vector<8x8xbf16>, vector<8x256xbf16>, vector<8x256xf32> -> vector<8x256xf32>
      %112 = arith.addf %106, %111 : vector<8x256xf32>
      %c0_63 = arith.constant 0 : index
      %c112_64 = arith.constant 112 : index
      %113 = vector.load %arg5[%c0_63, %c112_64] : memref<8x512xbf16, #tpu.memory_space<vmem>>, vector<8x256xbf16>
      %114 = vector.extract_strided_slice %101 {offsets = [1, 0, 0], sizes = [1, 8, 8], strides = [1, 1, 1]} : vector<9x8x8xbf16> to vector<1x8x8xbf16>
      %115 = vector.shape_cast %114 : vector<1x8x8xbf16> to vector<8x8xbf16>
      %cst_65 = arith.constant dense<0.000000e+00> : vector<8x256xf32>
      %116 = tpu.matmul %115, %113, %cst_65 {dimension_numbers = #tpu.dot_dimension_numbers<[1], [0], [0], [1], [0, 0, 1, 1], [], []>} : vector<8x8xbf16>, vector<8x256xbf16>, vector<8x256xf32> -> vector<8x256xf32>
      %117 = arith.addf %112, %116 : vector<8x256xf32>
      %c0_66 = arith.constant 0 : index
      %c113_67 = arith.constant 113 : index
      %118 = vector.load %arg5[%c0_66, %c113_67] : memref<8x512xbf16, #tpu.memory_space<vmem>>, vector<8x256xbf16>
      %119 = arith.select %31, %118, %32 : vector<8x256xi1>, vector<8x256xbf16>
      %120 = vector.extract_strided_slice %101 {offsets = [2, 0, 0], sizes = [1, 8, 8], strides = [1, 1, 1]} : vector<9x8x8xbf16> to vector<1x8x8xbf16>
      %121 = vector.shape_cast %120 : vector<1x8x8xbf16> to vector<8x8xbf16>
      %cst_68 = arith.constant dense<0.000000e+00> : vector<8x256xf32>
      %122 = tpu.matmul %121, %119, %cst_68 {dimension_numbers = #tpu.dot_dimension_numbers<[1], [0], [0], [1], [0, 0, 1, 1], [], []>} : vector<8x8xbf16>, vector<8x256xbf16>, vector<8x256xf32> -> vector<8x256xf32>
      %123 = arith.addf %117, %122 : vector<8x256xf32>
      %c0_69 = arith.constant 0 : index
      %c127_70 = arith.constant 127 : index
      %124 = vector.load %arg5[%c0_69, %c127_70] : memref<8x512xbf16, #tpu.memory_space<vmem>>, vector<8x256xbf16>
      %125 = arith.select %29, %124, %32 : vector<8x256xi1>, vector<8x256xbf16>
      %126 = vector.extract_strided_slice %101 {offsets = [3, 0, 0], sizes = [1, 8, 8], strides = [1, 1, 1]} : vector<9x8x8xbf16> to vector<1x8x8xbf16>
      %127 = vector.shape_cast %126 : vector<1x8x8xbf16> to vector<8x8xbf16>
      %cst_71 = arith.constant dense<0.000000e+00> : vector<8x256xf32>
      %128 = tpu.matmul %127, %125, %cst_71 {dimension_numbers = #tpu.dot_dimension_numbers<[1], [0], [0], [1], [0, 0, 1, 1], [], []>} : vector<8x8xbf16>, vector<8x256xbf16>, vector<8x256xf32> -> vector<8x256xf32>
      %129 = arith.addf %123, %128 : vector<8x256xf32>
      %c0_72 = arith.constant 0 : index
      %c128_73 = arith.constant 128 : index
      %130 = vector.load %arg5[%c0_72, %c128_73] : memref<8x512xbf16, #tpu.memory_space<vmem>>, vector<8x256xbf16>
      %131 = vector.extract_strided_slice %101 {offsets = [4, 0, 0], sizes = [1, 8, 8], strides = [1, 1, 1]} : vector<9x8x8xbf16> to vector<1x8x8xbf16>
      %132 = vector.shape_cast %131 : vector<1x8x8xbf16> to vector<8x8xbf16>
      %cst_74 = arith.constant dense<0.000000e+00> : vector<8x256xf32>
      %133 = tpu.matmul %132, %130, %cst_74 {dimension_numbers = #tpu.dot_dimension_numbers<[1], [0], [0], [1], [0, 0, 1, 1], [], []>} : vector<8x8xbf16>, vector<8x256xbf16>, vector<8x256xf32> -> vector<8x256xf32>
      %134 = arith.addf %129, %133 : vector<8x256xf32>
      %c0_75 = arith.constant 0 : index
      %c129_76 = arith.constant 129 : index
      %135 = vector.load %arg5[%c0_75, %c129_76] : memref<8x512xbf16, #tpu.memory_space<vmem>>, vector<8x256xbf16>
      %136 = arith.select %31, %135, %32 : vector<8x256xi1>, vector<8x256xbf16>
      %137 = vector.extract_strided_slice %101 {offsets = [5, 0, 0], sizes = [1, 8, 8], strides = [1, 1, 1]} : vector<9x8x8xbf16> to vector<1x8x8xbf16>
      %138 = vector.shape_cast %137 : vector<1x8x8xbf16> to vector<8x8xbf16>
      %cst_77 = arith.constant dense<0.000000e+00> : vector<8x256xf32>
      %139 = tpu.matmul %138, %136, %cst_77 {dimension_numbers = #tpu.dot_dimension_numbers<[1], [0], [0], [1], [0, 0, 1, 1], [], []>} : vector<8x8xbf16>, vector<8x256xbf16>, vector<8x256xf32> -> vector<8x256xf32>
      %140 = arith.addf %134, %139 : vector<8x256xf32>
      %c0_78 = arith.constant 0 : index
      %c143_79 = arith.constant 143 : index
      %141 = vector.load %arg5[%c0_78, %c143_79] : memref<8x512xbf16, #tpu.memory_space<vmem>>, vector<8x256xbf16>
      %142 = arith.select %29, %141, %32 : vector<8x256xi1>, vector<8x256xbf16>
      %143 = vector.extract_strided_slice %101 {offsets = [6, 0, 0], sizes = [1, 8, 8], strides = [1, 1, 1]} : vector<9x8x8xbf16> to vector<1x8x8xbf16>
      %144 = vector.shape_cast %143 : vector<1x8x8xbf16> to vector<8x8xbf16>
      %cst_80 = arith.constant dense<0.000000e+00> : vector<8x256xf32>
      %145 = tpu.matmul %144, %142, %cst_80 {dimension_numbers = #tpu.dot_dimension_numbers<[1], [0], [0], [1], [0, 0, 1, 1], [], []>} : vector<8x8xbf16>, vector<8x256xbf16>, vector<8x256xf32> -> vector<8x256xf32>
      %146 = arith.addf %140, %145 : vector<8x256xf32>
      %c0_81 = arith.constant 0 : index
      %c144_82 = arith.constant 144 : index
      %147 = vector.load %arg5[%c0_81, %c144_82] : memref<8x512xbf16, #tpu.memory_space<vmem>>, vector<8x256xbf16>
      %148 = vector.extract_strided_slice %101 {offsets = [7, 0, 0], sizes = [1, 8, 8], strides = [1, 1, 1]} : vector<9x8x8xbf16> to vector<1x8x8xbf16>
      %149 = vector.shape_cast %148 : vector<1x8x8xbf16> to vector<8x8xbf16>
      %cst_83 = arith.constant dense<0.000000e+00> : vector<8x256xf32>
      %150 = tpu.matmul %149, %147, %cst_83 {dimension_numbers = #tpu.dot_dimension_numbers<[1], [0], [0], [1], [0, 0, 1, 1], [], []>} : vector<8x8xbf16>, vector<8x256xbf16>, vector<8x256xf32> -> vector<8x256xf32>
      %151 = arith.addf %146, %150 : vector<8x256xf32>
      %c0_84 = arith.constant 0 : index
      %c145_85 = arith.constant 145 : index
      %152 = vector.load %arg5[%c0_84, %c145_85] : memref<8x512xbf16, #tpu.memory_space<vmem>>, vector<8x256xbf16>
      %153 = arith.select %31, %152, %32 : vector<8x256xi1>, vector<8x256xbf16>
      %154 = vector.extract_strided_slice %101 {offsets = [8, 0, 0], sizes = [1, 8, 8], strides = [1, 1, 1]} : vector<9x8x8xbf16> to vector<1x8x8xbf16>
      %155 = vector.shape_cast %154 : vector<1x8x8xbf16> to vector<8x8xbf16>
      %cst_86 = arith.constant dense<0.000000e+00> : vector<8x256xf32>
      %156 = tpu.matmul %155, %153, %cst_86 {dimension_numbers = #tpu.dot_dimension_numbers<[1], [0], [0], [1], [0, 0, 1, 1], [], []>} : vector<8x8xbf16>, vector<8x256xbf16>, vector<8x256xf32> -> vector<8x256xf32>
      %157 = arith.addf %151, %156 : vector<8x256xf32>
      %158 = vector.broadcast %105 : vector<8x1xf32> to vector<8x256xf32>
      %159 = arith.addf %157, %158 : vector<8x256xf32>
      %cst_87 = arith.constant 0.000000e+00 : f32
      %160 = vector.broadcast %cst_87 : f32 to vector<8x256xf32>
      %161 = arith.maximumf %159, %160 : vector<8x256xf32>
      %162 = arith.truncf %161 : vector<8x256xf32> to vector<8x256xbf16>
      %c0_88 = arith.constant 0 : index
      %c128_89 = arith.constant 128 : index
      %163 = vector.load %arg5[%c0_88, %c128_89] : memref<8x512xbf16, #tpu.memory_space<vmem>>, vector<8x256xbf16>
      tpu.vector_store %arg5[%c0_88, %c128_89], %162 {strides = array<i32>} : memref<8x512xbf16, #tpu.memory_space<vmem>>, vector<8x256xbf16>,
      %c2_i32_90 = arith.constant 2 : i32
      %164 = arith.muli %c2_i32_90, %arg7 : i32
      %c1_i32_91 = arith.constant 1 : i32
      %165 = arith.addi %164, %c1_i32_91 : i32
      %166 = arith.index_cast %165 : i32 to index
      %c0_92 = arith.constant 0 : index
      %c0_93 = arith.constant 0 : index
      %c0_94 = arith.constant 0 : index
      %167 = vector.load %arg2[%166, %c0_92, %c0_93, %c0_94] : memref<5x9x8x8xbf16, #tpu.memory_space<vmem>>, vector<1x9x8x8xbf16>
      %168 = vector.shape_cast %167 : vector<1x9x8x8xbf16> to vector<9x8x8xbf16>
      %c2_i32_95 = arith.constant 2 : i32
      %169 = arith.muli %c2_i32_95, %arg7 : i32
      %c1_i32_96 = arith.constant 1 : i32
      %170 = arith.addi %169, %c1_i32_96 : i32
      %171 = arith.index_cast %170 : i32 to index
      %c0_97 = arith.constant 0 : index
      %c0_98 = arith.constant 0 : index
      %172 = vector.load %arg3[%171, %c0_97, %c0_98] : memref<5x8x1xf32, #tpu.memory_space<vmem>>, vector<1x8x1xf32>
      %173 = vector.shape_cast %172 : vector<1x8x1xf32> to vector<8x1xf32>
      %cst_99 = arith.constant 0.000000e+00 : f32
      %174 = vector.broadcast %cst_99 : f32 to vector<8x256xf32>
      %c0_100 = arith.constant 0 : index
      %c111_101 = arith.constant 111 : index
      %175 = vector.load %arg5[%c0_100, %c111_101] : memref<8x512xbf16, #tpu.memory_space<vmem>>, vector<8x256xbf16>
      %176 = arith.select %29, %175, %32 : vector<8x256xi1>, vector<8x256xbf16>
      %177 = vector.extract_strided_slice %168 {offsets = [0, 0, 0], sizes = [1, 8, 8], strides = [1, 1, 1]} : vector<9x8x8xbf16> to vector<1x8x8xbf16>
      %178 = vector.shape_cast %177 : vector<1x8x8xbf16> to vector<8x8xbf16>
      %cst_102 = arith.constant dense<0.000000e+00> : vector<8x256xf32>
      %179 = tpu.matmul %178, %176, %cst_102 {dimension_numbers = #tpu.dot_dimension_numbers<[1], [0], [0], [1], [0, 0, 1, 1], [], []>} : vector<8x8xbf16>, vector<8x256xbf16>, vector<8x256xf32> -> vector<8x256xf32>
      %180 = arith.addf %174, %179 : vector<8x256xf32>
      %c0_103 = arith.constant 0 : index
      %c112_104 = arith.constant 112 : index
      %181 = vector.load %arg5[%c0_103, %c112_104] : memref<8x512xbf16, #tpu.memory_space<vmem>>, vector<8x256xbf16>
      %182 = vector.extract_strided_slice %168 {offsets = [1, 0, 0], sizes = [1, 8, 8], strides = [1, 1, 1]} : vector<9x8x8xbf16> to vector<1x8x8xbf16>
      %183 = vector.shape_cast %182 : vector<1x8x8xbf16> to vector<8x8xbf16>
      %cst_105 = arith.constant dense<0.000000e+00> : vector<8x256xf32>
      %184 = tpu.matmul %183, %181, %cst_105 {dimension_numbers = #tpu.dot_dimension_numbers<[1], [0], [0], [1], [0, 0, 1, 1], [], []>} : vector<8x8xbf16>, vector<8x256xbf16>, vector<8x256xf32> -> vector<8x256xf32>
      %185 = arith.addf %180, %184 : vector<8x256xf32>
      %c0_106 = arith.constant 0 : index
      %c113_107 = arith.constant 113 : index
      %186 = vector.load %arg5[%c0_106, %c113_107] : memref<8x512xbf16, #tpu.memory_space<vmem>>, vector<8x256xbf16>
      %187 = arith.select %31, %186, %32 : vector<8x256xi1>, vector<8x256xbf16>
      %188 = vector.extract_strided_slice %168 {offsets = [2, 0, 0], sizes = [1, 8, 8], strides = [1, 1, 1]} : vector<9x8x8xbf16> to vector<1x8x8xbf16>
      %189 = vector.shape_cast %188 : vector<1x8x8xbf16> to vector<8x8xbf16>
      %cst_108 = arith.constant dense<0.000000e+00> : vector<8x256xf32>
      %190 = tpu.matmul %189, %187, %cst_108 {dimension_numbers = #tpu.dot_dimension_numbers<[1], [0], [0], [1], [0, 0, 1, 1], [], []>} : vector<8x8xbf16>, vector<8x256xbf16>, vector<8x256xf32> -> vector<8x256xf32>
      %191 = arith.addf %185, %190 : vector<8x256xf32>
      %c0_109 = arith.constant 0 : index
      %c127_110 = arith.constant 127 : index
      %192 = vector.load %arg5[%c0_109, %c127_110] : memref<8x512xbf16, #tpu.memory_space<vmem>>, vector<8x256xbf16>
      %193 = arith.select %29, %192, %32 : vector<8x256xi1>, vector<8x256xbf16>
      %194 = vector.extract_strided_slice %168 {offsets = [3, 0, 0], sizes = [1, 8, 8], strides = [1, 1, 1]} : vector<9x8x8xbf16> to vector<1x8x8xbf16>
      %195 = vector.shape_cast %194 : vector<1x8x8xbf16> to vector<8x8xbf16>
      %cst_111 = arith.constant dense<0.000000e+00> : vector<8x256xf32>
      %196 = tpu.matmul %195, %193, %cst_111 {dimension_numbers = #tpu.dot_dimension_numbers<[1], [0], [0], [1], [0, 0, 1, 1], [], []>} : vector<8x8xbf16>, vector<8x256xbf16>, vector<8x256xf32> -> vector<8x256xf32>
      %197 = arith.addf %191, %196 : vector<8x256xf32>
      %c0_112 = arith.constant 0 : index
      %c128_113 = arith.constant 128 : index
      %198 = vector.load %arg5[%c0_112, %c128_113] : memref<8x512xbf16, #tpu.memory_space<vmem>>, vector<8x256xbf16>
      %199 = vector.extract_strided_slice %168 {offsets = [4, 0, 0], sizes = [1, 8, 8], strides = [1, 1, 1]} : vector<9x8x8xbf16> to vector<1x8x8xbf16>
      %200 = vector.shape_cast %199 : vector<1x8x8xbf16> to vector<8x8xbf16>
      %cst_114 = arith.constant dense<0.000000e+00> : vector<8x256xf32>
      %201 = tpu.matmul %200, %198, %cst_114 {dimension_numbers = #tpu.dot_dimension_numbers<[1], [0], [0], [1], [0, 0, 1, 1], [], []>} : vector<8x8xbf16>, vector<8x256xbf16>, vector<8x256xf32> -> vector<8x256xf32>
      %202 = arith.addf %197, %201 : vector<8x256xf32>
      %c0_115 = arith.constant 0 : index
      %c129_116 = arith.constant 129 : index
      %203 = vector.load %arg5[%c0_115, %c129_116] : memref<8x512xbf16, #tpu.memory_space<vmem>>, vector<8x256xbf16>
      %204 = arith.select %31, %203, %32 : vector<8x256xi1>, vector<8x256xbf16>
      %205 = vector.extract_strided_slice %168 {offsets = [5, 0, 0], sizes = [1, 8, 8], strides = [1, 1, 1]} : vector<9x8x8xbf16> to vector<1x8x8xbf16>
      %206 = vector.shape_cast %205 : vector<1x8x8xbf16> to vector<8x8xbf16>
      %cst_117 = arith.constant dense<0.000000e+00> : vector<8x256xf32>
      %207 = tpu.matmul %206, %204, %cst_117 {dimension_numbers = #tpu.dot_dimension_numbers<[1], [0], [0], [1], [0, 0, 1, 1], [], []>} : vector<8x8xbf16>, vector<8x256xbf16>, vector<8x256xf32> -> vector<8x256xf32>
      %208 = arith.addf %202, %207 : vector<8x256xf32>
      %c0_118 = arith.constant 0 : index
      %c143_119 = arith.constant 143 : index
      %209 = vector.load %arg5[%c0_118, %c143_119] : memref<8x512xbf16, #tpu.memory_space<vmem>>, vector<8x256xbf16>
      %210 = arith.select %29, %209, %32 : vector<8x256xi1>, vector<8x256xbf16>
      %211 = vector.extract_strided_slice %168 {offsets = [6, 0, 0], sizes = [1, 8, 8], strides = [1, 1, 1]} : vector<9x8x8xbf16> to vector<1x8x8xbf16>
      %212 = vector.shape_cast %211 : vector<1x8x8xbf16> to vector<8x8xbf16>
      %cst_120 = arith.constant dense<0.000000e+00> : vector<8x256xf32>
      %213 = tpu.matmul %212, %210, %cst_120 {dimension_numbers = #tpu.dot_dimension_numbers<[1], [0], [0], [1], [0, 0, 1, 1], [], []>} : vector<8x8xbf16>, vector<8x256xbf16>, vector<8x256xf32> -> vector<8x256xf32>
      %214 = arith.addf %208, %213 : vector<8x256xf32>
      %c0_121 = arith.constant 0 : index
      %c144_122 = arith.constant 144 : index
      %215 = vector.load %arg5[%c0_121, %c144_122] : memref<8x512xbf16, #tpu.memory_space<vmem>>, vector<8x256xbf16>
      %216 = vector.extract_strided_slice %168 {offsets = [7, 0, 0], sizes = [1, 8, 8], strides = [1, 1, 1]} : vector<9x8x8xbf16> to vector<1x8x8xbf16>
      %217 = vector.shape_cast %216 : vector<1x8x8xbf16> to vector<8x8xbf16>
      %cst_123 = arith.constant dense<0.000000e+00> : vector<8x256xf32>
      %218 = tpu.matmul %217, %215, %cst_123 {dimension_numbers = #tpu.dot_dimension_numbers<[1], [0], [0], [1], [0, 0, 1, 1], [], []>} : vector<8x8xbf16>, vector<8x256xbf16>, vector<8x256xf32> -> vector<8x256xf32>
      %219 = arith.addf %214, %218 : vector<8x256xf32>
      %c0_124 = arith.constant 0 : index
      %c145_125 = arith.constant 145 : index
      %220 = vector.load %arg5[%c0_124, %c145_125] : memref<8x512xbf16, #tpu.memory_space<vmem>>, vector<8x256xbf16>
      %221 = arith.select %31, %220, %32 : vector<8x256xi1>, vector<8x256xbf16>
      %222 = vector.extract_strided_slice %168 {offsets = [8, 0, 0], sizes = [1, 8, 8], strides = [1, 1, 1]} : vector<9x8x8xbf16> to vector<1x8x8xbf16>
      %223 = vector.shape_cast %222 : vector<1x8x8xbf16> to vector<8x8xbf16>
      %cst_126 = arith.constant dense<0.000000e+00> : vector<8x256xf32>
      %224 = tpu.matmul %223, %221, %cst_126 {dimension_numbers = #tpu.dot_dimension_numbers<[1], [0], [0], [1], [0, 0, 1, 1], [], []>} : vector<8x8xbf16>, vector<8x256xbf16>, vector<8x256xf32> -> vector<8x256xf32>
      %225 = arith.addf %219, %224 : vector<8x256xf32>
      %226 = vector.broadcast %173 : vector<8x1xf32> to vector<8x256xf32>
      %227 = arith.addf %225, %226 : vector<8x256xf32>
      %c0_127 = arith.constant 0 : index
      %c0_128 = arith.constant 0 : index
      %228 = vector.load %arg6[%c0_127, %c0_128] : memref<8x256xf32, #tpu.memory_space<vmem>>, vector<8x256xf32>
      %229 = arith.addf %227, %228 : vector<8x256xf32>
      %c0_129 = arith.constant 0 : index
      %c0_130 = arith.constant 0 : index
      %230 = vector.load %arg6[%c0_129, %c0_130] : memref<8x256xf32, #tpu.memory_space<vmem>>, vector<8x256xf32>
      tpu.vector_store %arg6[%c0_129, %c0_130], %229 {strides = array<i32>} : memref<8x256xf32, #tpu.memory_space<vmem>>, vector<8x256xf32>,
      %231 = arith.truncf %229 : vector<8x256xf32> to vector<8x256xbf16>
      %c0_131 = arith.constant 0 : index
      %c128_132 = arith.constant 128 : index
      %232 = vector.load %arg5[%c0_131, %c128_132] : memref<8x512xbf16, #tpu.memory_space<vmem>>, vector<8x256xbf16>
      tpu.vector_store %arg5[%c0_131, %c128_132], %231 {strides = array<i32>} : memref<8x512xbf16, #tpu.memory_space<vmem>>, vector<8x256xbf16>,
    }
    %c2_i32_19 = arith.constant 2 : i32
    %c4 = arith.constant 4 : index
    %c0_20 = arith.constant 0 : index
    %c0_21 = arith.constant 0 : index
    %c0_22 = arith.constant 0 : index
    %34 = vector.load %arg2[%c4, %c0_20, %c0_21, %c0_22] : memref<5x9x8x8xbf16, #tpu.memory_space<vmem>>, vector<1x9x8x8xbf16>
    %35 = vector.shape_cast %34 : vector<1x9x8x8xbf16> to vector<9x8x8xbf16>
    %c4_23 = arith.constant 4 : index
    %c0_24 = arith.constant 0 : index
    %c0_25 = arith.constant 0 : index
    %36 = vector.load %arg3[%c4_23, %c0_24, %c0_25] : memref<5x8x1xf32, #tpu.memory_space<vmem>>, vector<1x8x1xf32>
    %37 = vector.shape_cast %36 : vector<1x8x1xf32> to vector<8x1xf32>
    %cst_26 = arith.constant 0.000000e+00 : f32
    %38 = vector.broadcast %cst_26 : f32 to vector<8x256xf32>
    %c0_27 = arith.constant 0 : index
    %c111 = arith.constant 111 : index
    %39 = vector.load %arg5[%c0_27, %c111] : memref<8x512xbf16, #tpu.memory_space<vmem>>, vector<8x256xbf16>
    %40 = arith.select %29, %39, %32 : vector<8x256xi1>, vector<8x256xbf16>
    %41 = vector.extract_strided_slice %35 {offsets = [0, 0, 0], sizes = [1, 8, 8], strides = [1, 1, 1]} : vector<9x8x8xbf16> to vector<1x8x8xbf16>
    %42 = vector.shape_cast %41 : vector<1x8x8xbf16> to vector<8x8xbf16>
    %cst_28 = arith.constant dense<0.000000e+00> : vector<8x256xf32>
    %43 = tpu.matmul %42, %40, %cst_28 {dimension_numbers = #tpu.dot_dimension_numbers<[1], [0], [0], [1], [0, 0, 1, 1], [], []>} : vector<8x8xbf16>, vector<8x256xbf16>, vector<8x256xf32> -> vector<8x256xf32>
    %44 = arith.addf %38, %43 : vector<8x256xf32>
    %c0_29 = arith.constant 0 : index
    %c112 = arith.constant 112 : index
    %45 = vector.load %arg5[%c0_29, %c112] : memref<8x512xbf16, #tpu.memory_space<vmem>>, vector<8x256xbf16>
    %46 = vector.extract_strided_slice %35 {offsets = [1, 0, 0], sizes = [1, 8, 8], strides = [1, 1, 1]} : vector<9x8x8xbf16> to vector<1x8x8xbf16>
    %47 = vector.shape_cast %46 : vector<1x8x8xbf16> to vector<8x8xbf16>
    %cst_30 = arith.constant dense<0.000000e+00> : vector<8x256xf32>
    %48 = tpu.matmul %47, %45, %cst_30 {dimension_numbers = #tpu.dot_dimension_numbers<[1], [0], [0], [1], [0, 0, 1, 1], [], []>} : vector<8x8xbf16>, vector<8x256xbf16>, vector<8x256xf32> -> vector<8x256xf32>
    %49 = arith.addf %44, %48 : vector<8x256xf32>
    %c0_31 = arith.constant 0 : index
    %c113 = arith.constant 113 : index
    %50 = vector.load %arg5[%c0_31, %c113] : memref<8x512xbf16, #tpu.memory_space<vmem>>, vector<8x256xbf16>
    %51 = arith.select %31, %50, %32 : vector<8x256xi1>, vector<8x256xbf16>
    %52 = vector.extract_strided_slice %35 {offsets = [2, 0, 0], sizes = [1, 8, 8], strides = [1, 1, 1]} : vector<9x8x8xbf16> to vector<1x8x8xbf16>
    %53 = vector.shape_cast %52 : vector<1x8x8xbf16> to vector<8x8xbf16>
    %cst_32 = arith.constant dense<0.000000e+00> : vector<8x256xf32>
    %54 = tpu.matmul %53, %51, %cst_32 {dimension_numbers = #tpu.dot_dimension_numbers<[1], [0], [0], [1], [0, 0, 1, 1], [], []>} : vector<8x8xbf16>, vector<8x256xbf16>, vector<8x256xf32> -> vector<8x256xf32>
    %55 = arith.addf %49, %54 : vector<8x256xf32>
    %c0_33 = arith.constant 0 : index
    %c127 = arith.constant 127 : index
    %56 = vector.load %arg5[%c0_33, %c127] : memref<8x512xbf16, #tpu.memory_space<vmem>>, vector<8x256xbf16>
    %57 = arith.select %29, %56, %32 : vector<8x256xi1>, vector<8x256xbf16>
    %58 = vector.extract_strided_slice %35 {offsets = [3, 0, 0], sizes = [1, 8, 8], strides = [1, 1, 1]} : vector<9x8x8xbf16> to vector<1x8x8xbf16>
    %59 = vector.shape_cast %58 : vector<1x8x8xbf16> to vector<8x8xbf16>
    %cst_34 = arith.constant dense<0.000000e+00> : vector<8x256xf32>
    %60 = tpu.matmul %59, %57, %cst_34 {dimension_numbers = #tpu.dot_dimension_numbers<[1], [0], [0], [1], [0, 0, 1, 1], [], []>} : vector<8x8xbf16>, vector<8x256xbf16>, vector<8x256xf32> -> vector<8x256xf32>
    %61 = arith.addf %55, %60 : vector<8x256xf32>
    %c0_35 = arith.constant 0 : index
    %c128_36 = arith.constant 128 : index
    %62 = vector.load %arg5[%c0_35, %c128_36] : memref<8x512xbf16, #tpu.memory_space<vmem>>, vector<8x256xbf16>
    %63 = vector.extract_strided_slice %35 {offsets = [4, 0, 0], sizes = [1, 8, 8], strides = [1, 1, 1]} : vector<9x8x8xbf16> to vector<1x8x8xbf16>
    %64 = vector.shape_cast %63 : vector<1x8x8xbf16> to vector<8x8xbf16>
    %cst_37 = arith.constant dense<0.000000e+00> : vector<8x256xf32>
    %65 = tpu.matmul %64, %62, %cst_37 {dimension_numbers = #tpu.dot_dimension_numbers<[1], [0], [0], [1], [0, 0, 1, 1], [], []>} : vector<8x8xbf16>, vector<8x256xbf16>, vector<8x256xf32> -> vector<8x256xf32>
    %66 = arith.addf %61, %65 : vector<8x256xf32>
    %c0_38 = arith.constant 0 : index
    %c129 = arith.constant 129 : index
    %67 = vector.load %arg5[%c0_38, %c129] : memref<8x512xbf16, #tpu.memory_space<vmem>>, vector<8x256xbf16>
    %68 = arith.select %31, %67, %32 : vector<8x256xi1>, vector<8x256xbf16>
    %69 = vector.extract_strided_slice %35 {offsets = [5, 0, 0], sizes = [1, 8, 8], strides = [1, 1, 1]} : vector<9x8x8xbf16> to vector<1x8x8xbf16>
    %70 = vector.shape_cast %69 : vector<1x8x8xbf16> to vector<8x8xbf16>
    %cst_39 = arith.constant dense<0.000000e+00> : vector<8x256xf32>
    %71 = tpu.matmul %70, %68, %cst_39 {dimension_numbers = #tpu.dot_dimension_numbers<[1], [0], [0], [1], [0, 0, 1, 1], [], []>} : vector<8x8xbf16>, vector<8x256xbf16>, vector<8x256xf32> -> vector<8x256xf32>
    %72 = arith.addf %66, %71 : vector<8x256xf32>
    %c0_40 = arith.constant 0 : index
    %c143 = arith.constant 143 : index
    %73 = vector.load %arg5[%c0_40, %c143] : memref<8x512xbf16, #tpu.memory_space<vmem>>, vector<8x256xbf16>
    %74 = arith.select %29, %73, %32 : vector<8x256xi1>, vector<8x256xbf16>
    %75 = vector.extract_strided_slice %35 {offsets = [6, 0, 0], sizes = [1, 8, 8], strides = [1, 1, 1]} : vector<9x8x8xbf16> to vector<1x8x8xbf16>
    %76 = vector.shape_cast %75 : vector<1x8x8xbf16> to vector<8x8xbf16>
    %cst_41 = arith.constant dense<0.000000e+00> : vector<8x256xf32>
    %77 = tpu.matmul %76, %74, %cst_41 {dimension_numbers = #tpu.dot_dimension_numbers<[1], [0], [0], [1], [0, 0, 1, 1], [], []>} : vector<8x8xbf16>, vector<8x256xbf16>, vector<8x256xf32> -> vector<8x256xf32>
    %78 = arith.addf %72, %77 : vector<8x256xf32>
    %c0_42 = arith.constant 0 : index
    %c144 = arith.constant 144 : index
    %79 = vector.load %arg5[%c0_42, %c144] : memref<8x512xbf16, #tpu.memory_space<vmem>>, vector<8x256xbf16>
    %80 = vector.extract_strided_slice %35 {offsets = [7, 0, 0], sizes = [1, 8, 8], strides = [1, 1, 1]} : vector<9x8x8xbf16> to vector<1x8x8xbf16>
    %81 = vector.shape_cast %80 : vector<1x8x8xbf16> to vector<8x8xbf16>
    %cst_43 = arith.constant dense<0.000000e+00> : vector<8x256xf32>
    %82 = tpu.matmul %81, %79, %cst_43 {dimension_numbers = #tpu.dot_dimension_numbers<[1], [0], [0], [1], [0, 0, 1, 1], [], []>} : vector<8x8xbf16>, vector<8x256xbf16>, vector<8x256xf32> -> vector<8x256xf32>
    %83 = arith.addf %78, %82 : vector<8x256xf32>
    %c0_44 = arith.constant 0 : index
    %c145 = arith.constant 145 : index
    %84 = vector.load %arg5[%c0_44, %c145] : memref<8x512xbf16, #tpu.memory_space<vmem>>, vector<8x256xbf16>
    %85 = arith.select %31, %84, %32 : vector<8x256xi1>, vector<8x256xbf16>
    %86 = vector.extract_strided_slice %35 {offsets = [8, 0, 0], sizes = [1, 8, 8], strides = [1, 1, 1]} : vector<9x8x8xbf16> to vector<1x8x8xbf16>
    %87 = vector.shape_cast %86 : vector<1x8x8xbf16> to vector<8x8xbf16>
    %cst_45 = arith.constant dense<0.000000e+00> : vector<8x256xf32>
    %88 = tpu.matmul %87, %85, %cst_45 {dimension_numbers = #tpu.dot_dimension_numbers<[1], [0], [0], [1], [0, 0, 1, 1], [], []>} : vector<8x8xbf16>, vector<8x256xbf16>, vector<8x256xf32> -> vector<8x256xf32>
    %89 = arith.addf %83, %88 : vector<8x256xf32>
    %90 = vector.broadcast %37 : vector<8x1xf32> to vector<8x256xf32>
    %91 = arith.addf %89, %90 : vector<8x256xf32>
    %c0_46 = arith.constant 0 : index
    %c0_47 = arith.constant 0 : index
    %c0_48 = arith.constant 0 : index
    %92 = vector.load %arg1[%c0_46, %c0_47, %c0_48] : memref<1x8x256xf32, #tpu.memory_space<vmem>>, vector<1x8x256xf32>
    %93 = vector.shape_cast %92 : vector<1x8x256xf32> to vector<8x256xf32>
    %94 = arith.addf %91, %93 : vector<8x256xf32>
    %c0_49 = arith.constant 0 : index
    %c0_50 = arith.constant 0 : index
    %c0_51 = arith.constant 0 : index
    %95 = vector.load %arg4[%c0_49, %c0_50, %c0_51] : memref<1x8x256xf32, #tpu.memory_space<vmem>>, vector<1x8x256xf32>
    %96 = vector.shape_cast %95 : vector<1x8x256xf32> to vector<8x256xf32>
    %97 = vector.shape_cast %94 : vector<8x256xf32> to vector<1x8x256xf32>
    tpu.vector_store %arg4[%c0_49, %c0_50, %c0_51], %97 {strides = array<i32>} : memref<1x8x256xf32, #tpu.memory_space<vmem>>, vector<1x8x256xf32>,
    return
  }
  func.func @transform_0(%arg0: i32) -> (i32, i32, i32) {
    %c0_i32 = arith.constant 0 : i32
    %c0_i32_0 = arith.constant 0 : i32
    %c0_i32_1 = arith.constant 0 : i32
    return %arg0, %c0_i32, %c0_i32_0 : i32, i32, i32
  }
  func.func @transform_1(%arg0: i32) -> (i32, i32, i32, i32) {
    %c0_i32 = arith.constant 0 : i32
    %c0_i32_0 = arith.constant 0 : i32
    %c0_i32_1 = arith.constant 0 : i32
    %c0_i32_2 = arith.constant 0 : i32
    %c0_i32_3 = arith.constant 0 : i32
    return %c0_i32, %c0_i32_0, %c0_i32_1, %c0_i32_2 : i32, i32, i32, i32
  }
  func.func @transform_2(%arg0: i32) -> (i32, i32, i32) {
    %c0_i32 = arith.constant 0 : i32
    %c0_i32_0 = arith.constant 0 : i32
    %c0_i32_1 = arith.constant 0 : i32
    %c0_i32_2 = arith.constant 0 : i32
    return %c0_i32, %c0_i32_0, %c0_i32_1 : i32, i32, i32
  }
  func.func @transform_3(%arg0: i32) -> (i32, i32, i32) {
    %c0_i32 = arith.constant 0 : i32
    %c0_i32_0 = arith.constant 0 : i32
    %c0_i32_1 = arith.constant 0 : i32
    return %arg0, %c0_i32, %c0_i32_0 : i32, i32, i32
  }
}

</mosaic_0001>

<llo_original>
// kernel: residual_group_forward.1
$region0: #{residual_group_forward.1}
  #allocation0 [shape = 'u32[]', space=smem, size = 0x4, offset = 0x4, fixed_abs, tag = 'smem constant byte address 0x4 - core index']
  #allocation1 [shape = 'u32[72,128]{1,0:T(1,128)}', space=vmem, size = 0x9000, scoped, tag = 'internal scratch']
  #allocation2 [shape = 'bf16[8,512]{1,0:T(8,128)(2,1)}', space=vmem, size = 0x2000, scoped, tag = 'scratch operand']
  #allocation3 [shape = 'f32[8,256]{1,0:T(8,128)}', space=vmem, size = 0x2000, scoped, tag = 'scratch operand']
  %s0 = inlined_call_operand.vmem [shape: f32[2,8,256], index: 0, kind: input, shape index: {}]
  %s1 = inlined_call_operand.vmem [shape: bf16[5,9,8,8], index: 1, kind: input, shape index: {}]
  %s2 = inlined_call_operand.vmem [shape: f32[5,8,1], index: 2, kind: input, shape index: {}]
  %s3 = inlined_call_operand.vmem [shape: f32[2,8,256], index: 3, kind: output, shape index: {}]
  %s4 = sld [smem:[#allocation0]]
  $region52: #{residual_group_forward.1} parent=0
    _
  %s6 = ssub.s32 1, %s4
  %s7 = scalar_select 0, %s6, %s4
  loop: start=0, step=1, limit=4
  $region2: #{residual_group_forward.1} parent=0 // loop_pre_header
    _
  $region3: #{residual_group_forward.1} parent=0 // loop_header
    %s9 = sphi 0, %s13
    %p10 = scmp.ge.s32.totalorder %s9, 4
    %s19 = sphi 0, %s21
    %s22 = sphi 0, %s19
    %s23 = sphi 0, %s22
    %s39 = sphi 0, %s23
    %s43 = sphi 0, %s43
    %s45 = sphi 0, %s43
    %s46 = sphi 0, %s45
    %s60 = sphi 0, %s46
    %s64 = sphi 0, %s64
    %s66 = sphi 0, %s64
    %s67 = sphi 0, %s66
    %s81 = sphi 0, %s67
    %s87 = sphi 0, %s89
    %s90 = sphi 0, %s87
    %s91 = sphi 0, %s90
    %s107 = sphi 0, %s91
  $region4: #{residual_group_forward.1} parent=0 // loop_header_branch
    %12 = sbr.rel (%p10) target = $region8
  $region5: #{residual_group_forward.1} parent=0 // loop_body
    %s14 = ssub.s32 %s9, 1
    %s15 = ssub.s32 %s9, 2
    %s16 = sadd.s32 %s9, 1
    %s17 = ssub.s32 %s9, %s16
    %p18 = scmp.eq.s32.totalorder %s17, 0
    %s20 = sadd.s32 %s19, 1
    %s21 = scalar_select %p18, %s19, %s20
    %p24 = pneg %p18
    %p25 = scmp.eq.s32.totalorder %s9, 1
    %p26 = por %p24, %p25
    %p27 = scmp.ne.s32.totalorder %s19, %s22
    %p28 = scmp.eq.s32.totalorder %s9, 0
    %p29 = por %p27, %p28
    %p30 = scmp.ne.s32.totalorder %s19, %s22
    %p31 = scmp.eq.s32.totalorder %s14, 1
    %p32 = por %p30, %p31
    %p33 = scmp.ne.s32.totalorder %s22, %s23
    %p34 = scmp.eq.s32.totalorder %s14, 0
    %p35 = por %p33, %p34
    %p36 = scmp.ne.s32.totalorder %s22, %s23
    %p37 = scmp.eq.s32.totalorder %s15, 1
    %p38 = por %p36, %p37
    %p40 = scmp.ne.s32.totalorder %s23, %s39
    %p41 = scmp.eq.s32.totalorder %s15, 0
    %p42 = por %p40, %p41
    %s44 = sadd.s32 %s43, 1
    %p47 = scmp.eq.s32.totalorder %s9, 1
    %p48 = scmp.ne.s32.totalorder %s43, %s45
    %p49 = scmp.eq.s32.totalorder %s9, 0
    %p50 = por %p48, %p49
    %p51 = scmp.ne.s32.totalorder %s43, %s45
    %p52 = scmp.eq.s32.totalorder %s14, 1
    %p53 = por %p51, %p52
    %p54 = scmp.ne.s32.totalorder %s45, %s46
    %p55 = scmp.eq.s32.totalorder %s14, 0
    %p56 = por %p54, %p55
    %p57 = scmp.ne.s32.totalorder %s45, %s46
    %p58 = scmp.eq.s32.totalorder %s15, 1
    %p59 = por %p57, %p58
    %p61 = scmp.ne.s32.totalorder %s46, %s60
    %p62 = scmp.eq.s32.totalorder %s15, 0
    %p63 = por %p61, %p62
    %s65 = sadd.s32 %s64, 1
    %p68 = scmp.eq.s32.totalorder %s9, 1
    %p69 = scmp.ne.s32.totalorder %s64, %s66
    %p70 = scmp.eq.s32.totalorder %s9, 0
    %p71 = por %p69, %p70
    %p72 = scmp.ne.s32.totalorder %s64, %s66
    %p73 = scmp.eq.s32.totalorder %s14, 1
    %p74 = por %p72, %p73
    %p75 = scmp.ne.s32.totalorder %s66, %s67
    %p76 = scmp.eq.s32.totalorder %s14, 0
    %p77 = por %p75, %p76
    %p78 = scmp.ne.s32.totalorder %s66, %s67
    %p79 = scmp.eq.s32.totalorder %s15, 1
    %p80 = por %p78, %p79
    %p82 = scmp.ne.s32.totalorder %s67, %s81
    %p83 = scmp.eq.s32.totalorder %s15, 0
    %p84 = por %p82, %p83
    %s85 = ssub.s32 %s9, %s16
    %p86 = scmp.eq.s32.totalorder %s85, 0
    %s88 = sadd.s32 %s87, 1
    %s89 = scalar_select %p86, %s87, %s88
    %p92 = pneg %p86
    %p93 = scmp.eq.s32.totalorder %s9, 1
    %p94 = por %p92, %p93
    %p95 = scmp.ne.s32.totalorder %s87, %s90
    %p96 = scmp.eq.s32.totalorder %s9, 0
    %p97 = por %p95, %p96
    %p98 = scmp.ne.s32.totalorder %s87, %s90
    %p99 = scmp.eq.s32.totalorder %s14, 1
    %p100 = por %p98, %p99
    %p101 = scmp.ne.s32.totalorder %s90, %s91
    %p102 = scmp.eq.s32.totalorder %s14, 0
    %p103 = por %p101, %p102
    %p104 = scmp.ne.s32.totalorder %s90, %s91
    %p105 = scmp.eq.s32.totalorder %s15, 1
    %p106 = por %p104, %p105
    %p108 = scmp.ne.s32.totalorder %s91, %s107
    %p109 = scmp.eq.s32.totalorder %s15, 0
    %p110 = por %p108, %p109
    %p111 = scmp.le.s32.totalorder 1, %s9
    %p112 = scmp.lt.s32.totalorder %s9, 3
    %p113 = pnand %p111, %p112
    %p114 = pneg %p113
    // Predicated region
    $region9: #{residual_group_forward.1} parent=5 // pred_check
      _
    $region10: #{residual_group_forward.1} parent=5 // pred_check_branch
      %116 = sbr.rel (%p113) target = $region12
    $region11: #{residual_group_forward.1} parent=5 // pred_region
      %s117 = ssub.s32 %s9, 1
      // Predicated region
      $region13: #{residual_group_forward.1} parent=11 // pred_check
        %p118 = pneg %p56
      $region14: #{residual_group_forward.1} parent=11 // pred_check_branch
        %120 = sbr.rel (%p118) target = $region16
      $region15: #{residual_group_forward.1} parent=11 // pred_region
        _
      $region16: #{residual_group_forward.1} parent=11 // pred_fallthru
        _
      // Predicated region
      $region17: #{residual_group_forward.1} parent=11 // pred_check
        %p121 = pneg %p77
      $region18: #{residual_group_forward.1} parent=11 // pred_check_branch
        %123 = sbr.rel (%p121) target = $region20
      $region19: #{residual_group_forward.1} parent=11 // pred_region
        _
      $region20: #{residual_group_forward.1} parent=11 // pred_fallthru
        _
    $region12: #{residual_group_forward.1} parent=5 // pred_fallthru
      _
    %p124 = scmp.lt.s32.totalorder %s9, 2
    // Predicated region
    $region21: #{residual_group_forward.1} parent=5 // pred_check
      %p125 = pneg %p124
    $region22: #{residual_group_forward.1} parent=5 // pred_check_branch
      %127 = sbr.rel (%p125) target = $region24
    $region23: #{residual_group_forward.1} parent=5 // pred_region
      // Predicated region
      $region25: #{residual_group_forward.1} parent=23 // pred_check
        %p128 = pneg %p29
      $region26: #{residual_group_forward.1} parent=23 // pred_check_branch
        %130 = sbr.rel (%p128) target = $region28
      $region27: #{residual_group_forward.1} parent=23 // pred_region
        %p131 = scmp.lt.s32.totalorder %s9, 1
        %s132 = scalar_select %p131, %s9, 1
        %s133 = smul.addr %s132, 2
        %s134 = smul.addr %s133, 8
        %s135 = scalar_lea.vmem %s0, %s134
      $region28: #{residual_group_forward.1} parent=23 // pred_fallthru
        _
    $region24: #{residual_group_forward.1} parent=5 // pred_fallthru
      _
    %p136 = scmp.le.s32.totalorder 1, %s9
    %p137 = scmp.lt.s32.totalorder %s9, 3
    %p138 = pnand %p136, %p137
    %p139 = pneg %p138
    // Predicated region
    $region29: #{residual_group_forward.1} parent=5 // pred_check
      _
    $region30: #{residual_group_forward.1} parent=5 // pred_check_branch
      %141 = sbr.rel (%p138) target = $region32
    $region31: #{residual_group_forward.1} parent=5 // pred_region
      %s142 = ssub.s32 %s9, 1
      %p143 = scmp.lt.s32.totalorder %s14, 1
      %s144 = scalar_select %p143, %s14, 1
      %s145 = smul.addr %s144, 2
      %s146 = smul.addr %s145, 8
      %s147 = scalar_lea.vmem %s0, %s146
      %p148 = pneg %p35
      %p149 = pneg %p32
      %p150 = pneg %p56
      %p151 = pneg %p53
      %p152 = pneg %p77
      %p153 = pneg %p74
      %p154 = pneg %p103
      %p155 = pneg %p100
      %p156 = scmp.lt.s32.totalorder %s14, 1
      %s157 = scalar_select %p156, %s14, 1
      %s158 = smul.addr %s157, 2
      %s159 = smul.addr %s158, 8
      %s160 = scalar_lea.vmem %s3, %s159
      %p161 = scmp.lt.s32.totalorder %s14, 1
      %s162 = scalar_select %p161, %s14, 1
      %s163 = smul.addr %s162, 2
      %s164 = smul.addr %s163, 8
      %s165 = scalar_lea.vmem %s0, %s164
      %p166 = scmp.lt.s32.totalorder %s14, 1
      %s167 = scalar_select %p166, %s14, 1
      %s168 = smul.addr %s167, 2
      %s169 = smul.addr %s168, 8
      %s170 = scalar_lea.vmem %s3, %s169
      %174 = vst [vmem:[#allocation2] sm:$0xf] 0
      %175 = vst [vmem:[#allocation2 + $0xc] sm:$0xf] 0
      %v176 = vld [vmem:[%s165] sm:$0xff]
      %v177 = vld [vmem:[%s165 + $0x8] sm:$0xff]
      %v178 = vpack.c.bf16 %v177, %v176
      %179 = vst [vmem:[#allocation2 + $0x4] sm:$0xff] %v178
      %v180 = vld [vmem:[%s165] sm:$0xff]
      %v181 = vld [vmem:[%s165 + $0x8] sm:$0xff]
      %182 = vst [vmem:[#allocation3] sm:$0xff] %v180
      %183 = vst [vmem:[#allocation3 + $0x8] sm:$0xff] %v181
      %v184 = vlaneseq
      %v185 = vand.u32 %v184, 127
      %v186 = vadd.s32 %v185, 128
      %vm187 = vcmp.lt.s32.totalorder %v185, 0
      %v188 = vsub.s32 0, %v185
      %v189 = vsel %vm187, %v188, %v185
      %v190 = vshrl.u32 %v189, 4
      %v191 = vand.u32 %v189, 15
      %v192 = vsub.s32 0, %v191
      %v193 = vsel %vm187, %v192, %v191
      %vm194 = vcmp.lt.s32.totalorder %v186, 0
      %v195 = vsub.s32 0, %v186
      %v196 = vsel %vm194, %v195, %v186
      %v197 = vshrl.u32 %v196, 4
      %v198 = vand.u32 %v196, 15
      %v199 = vsub.s32 0, %v198
      %v200 = vsel %vm194, %v199, %v198
      %vm201 = vcmp.ne.s32.totalorder %v193, 0
      %vm202 = vcmp.ne.s32.totalorder %v200, 0
      %vm203 = vcmp.lt.s32.totalorder %v193, 0
      %vm204 = vcmp.lt.s32.totalorder %v200, 0
      %vm205 = vmand %vm203, %vm201
      %vm206 = vmand %vm204, %vm202
      %v207 = vadd.s32 %v193, 16
      %v208 = vadd.s32 %v200, 16
      %v209 = vsel %vm205, %v207, %v193
      %v210 = vsel %vm206, %v208, %v200
      %vm211 = vcmp.ne.s32.totalorder %v209, 0
      %vm212 = vcmp.ne.s32.totalorder %v210, 0
      %vm213 = vcmp.ne.s32.totalorder %v209, 15
      %vm214 = vcmp.ne.s32.totalorder %v210, 15
      loop: start=0, step=1, limit=2
      $region33: #{residual_group_forward.1} parent=31 // loop_pre_header
        _
      $region34: #{residual_group_forward.1} parent=31 // loop_header
        %s216 = sphi 0, %s220
        %p217 = scmp.ge.s32.totalorder %s216, 2
      $region35: #{residual_group_forward.1} parent=31 // loop_header_branch
        %219 = sbr.rel (%p217) target = $region39
      $region36: #{residual_group_forward.1} parent=31 // loop_body
        %s221 = smul.u32 %s216, 2
        %s222 = smul.u32 %s221, 9
        %s223 = smul.addr %s222, 4
        %s224 = scalar_lea.vmem %s1, %s223
        %v225 = vld [vmem:[%s224] sm:$0xf]
        %v226 = vld [vmem:[%s224 + $0x4] sm:$0xf]
        %v227 = vld [vmem:[%s224 + $0x8] sm:$0xf]
        %v228 = vld [vmem:[%s224 + $0xc] sm:$0xf]
        %v229 = vld [vmem:[%s224 + $0x10] sm:$0xf]
        %v230 = vld [vmem:[%s224 + $0x14] sm:$0xf]
        %v231 = vld [vmem:[%s224 + $0x18] sm:$0xf]
        %v232 = vld [vmem:[%s224 + $0x1c] sm:$0xf]
        %v233 = vld [vmem:[%s224 + $0x20] sm:$0xf]
        %s234 = smul.u32 %s221, 8
        %s235 = scalar_lea.vmem %s2, %s234
        %v236 = vld [vmem:[%s235] sm:$0xff]
        %v237 = vld [vmem:[#allocation2] sm:$0xff]
        %v238 = vld [vmem:[#allocation2 + $0x8] sm:$0xf]
        %vm239 = vmpackc.low %vm212, %vm211
        %v240 = vsel %vm239, 65537, 0
        %241 = vrot.lane.b32.xlu0 %v240, 111
        %v242 = vpop.permute.xlu0 %241
        %v243 = vrot.slane %v242, 4
        %vm244 = vcmask 908288
        %v245 = vsel %vm244, %v243, %v242
        %v246 = vunpack.c.l.b16 %v245
        %v247 = vunpack.c.h.b16 %v245
        %v248 = vunpack.c.l.b16 0
        %v249 = vunpack.c.h.b16 0
        %vm250 = vcmp.ne.s32.totalorder %v246, %v248
        %vm251 = vcmp.ne.s32.totalorder %v247, %v249
        %vm252 = vmpackc.low %vm251, %vm250
        %v253 = vunpack.c.l.b16 %v243
        %v254 = vunpack.c.h.b16 %v243
        %v255 = vunpack.c.l.b16 0
        %v256 = vunpack.c.h.b16 0
        %vm257 = vcmp.ne.s32.totalorder %v253, %v255
        %vm258 = vcmp.ne.s32.totalorder %v254, %v256
        %vm259 = vmpackc.low %vm258, %vm257
        %v260 = vsel %vm252, %v237, 0
        %v261 = vsel %vm259, %v238, 0
        %v264 = vunpack.c.l.b16 %v237
        %v265 = vunpack.c.h.b16 %v237
        %v266 = vunpack.c.l.b16 %v238
        %v267 = vpack.c.b16 %v264, %v264
        %v268 = vpack.c.b16 %v265, %v265
        %v269 = vpack.c.b16 %v266, %v266
        %270 = vrot.lane.b32.xlu0 %v267, 16
        %v271 = vpop.permute.xlu0 %270
        %272 = vrot.lane.b32.xlu0 %v268, 16
        %v273 = vpop.permute.xlu0 %272
        %274 = vrot.lane.b32.xlu0 %v269, 16
        %v275 = vpop.permute.xlu0 %274
        %vm276 = vcmask 130048
        %v277 = vsel %vm276, %v271, %v273
        %v278 = vsel %vm276, %v273, %v275
        %vm279 = vcmask 64512
        %v281 = vsel %vm279, %v226, 0
        %vm283 = vcmask 1043456
        %v285 = vsel %vm283, %v277, 0
        %v288 = vsel %vm283, %v278, 0
        %290 = vmatpush.bf16.msra.mxu0 0
        %291 = vmatpush.bf16.msra.mxu0 0
        %292 = vmatpush.bf16.msra.mxu0 0
        %293 = vmatpush.bf16.msra.mxu0 0
        %294 = vmatpush.bf16.msra.mxu0 0
        %295 = vmatpush.bf16.msra.mxu0 0
        %296 = vmatpush.bf16.msra.mxu0 0
        %297 = vmatpush.bf16.msra.mxu0 %v285
        %298 = vmatmul.bf16.gmra.mxu0 %v281
        %v299 = vpop.f32.mrf.mxu0
        %v300 = vadd.f32 0.0, %v299
        %v301 = vpop.f32.mrf.mxu0
        %302 = vdwg.mxu0
        %303 = vmatpush.bf16.msra.mxu0 0
        %304 = vmatpush.bf16.msra.mxu0 0
        %305 = vmatpush.bf16.msra.mxu0 0
        %306 = vmatpush.bf16.msra.mxu0 0
        %307 = vmatpush.bf16.msra.mxu0 0
        %308 = vmatpush.bf16.msra.mxu0 0
        %309 = vmatpush.bf16.msra.mxu0 0
        %310 = vmatpush.bf16.msra.mxu0 %v288
        %311 = vmatmul.bf16.gmra.mxu0 %v281
        %v312 = vpop.f32.mrf.mxu0
        %v313 = vadd.f32 0.0, %v312
        %v314 = vpop.f32.mrf.mxu0
        %315 = vdwg.mxu0
        %v318 = vunpack.c.l.b16 %v260
        %v319 = vunpack.c.h.b16 %v260
        %v320 = vunpack.c.l.b16 %v261
        %v321 = vpack.c.b16 %v318, %v318
        %v322 = vpack.c.b16 %v319, %v319
        %v323 = vpack.c.b16 %v320, %v320
        %324 = vrot.lane.b32.xlu0 %v321, 17
        %v325 = vpop.permute.xlu0 %324
        %326 = vrot.lane.b32.xlu0 %v322, 17
        %v327 = vpop.permute.xlu0 %326
        %328 = vrot.lane.b32.xlu0 %v323, 17
        %v329 = vpop.permute.xlu0 %328
        %vm330 = vcmask 138240
        %v331 = vsel %vm330, %v325, %v327
        %v332 = vsel %vm330, %v327, %v329
        %v334 = vsel %vm279, %v225, 0
        %v337 = vsel %vm283, %v331, 0
        %v340 = vsel %vm283, %v332, 0
        %342 = vmatpush.bf16.msra.mxu0 0
        %343 = vmatpush.bf16.msra.mxu0 0
        %344 = vmatpush.bf16.msra.mxu0 0
        %345 = vmatpush.bf16.msra.mxu0 0
        %346 = vmatpush.bf16.msra.mxu0 0
        %347 = vmatpush.bf16.msra.mxu0 0
        %348 = vmatpush.bf16.msra.mxu0 0
        %349 = vmatpush.bf16.msra.mxu0 %v337
        %350 = vmatmul.bf16.gmra.mxu0 %v334
        %v351 = vpop.f32.mrf.mxu0
        %v352 = vadd.f32 %v300, %v351
        %v353 = vpop.f32.mrf.mxu0
        %354 = vdwg.mxu0
        %355 = vmatpush.bf16.msra.mxu0 0
        %356 = vmatpush.bf16.msra.mxu0 0
        %357 = vmatpush.bf16.msra.mxu0 0
        %358 = vmatpush.bf16.msra.mxu0 0
        %359 = vmatpush.bf16.msra.mxu0 0
        %360 = vmatpush.bf16.msra.mxu0 0
        %361 = vmatpush.bf16.msra.mxu0 0
        %362 = vmatpush.bf16.msra.mxu0 %v340
        %363 = vmatmul.bf16.gmra.mxu0 %v334
        %v364 = vpop.f32.mrf.mxu0
        %v365 = vadd.f32 %v313, %v364
        %v366 = vpop.f32.mrf.mxu0
        %367 = vdwg.mxu0
        %vm368 = vmpackc.low %vm214, %vm213
        %v369 = vsel %vm368, 65537, 0
        %370 = vrot.lane.b32.xlu0 %v369, 113
        %v371 = vpop.permute.xlu0 %370
        %v372 = vrot.slane %v371, 4
        %vm373 = vcmask 924672
        %v374 = vsel %vm373, %v372, %v371
        %v375 = vunpack.c.l.b16 %v374
        %v376 = vunpack.c.h.b16 %v374
        %v377 = vunpack.c.l.b16 0
        %v378 = vunpack.c.h.b16 0
        %vm379 = vcmp.ne.s32.totalorder %v375, %v377
        %vm380 = vcmp.ne.s32.totalorder %v376, %v378
        %vm381 = vmpackc.low %vm380, %vm379
        %v382 = vunpack.c.l.b16 %v372
        %v383 = vunpack.c.h.b16 %v372
        %v384 = vunpack.c.l.b16 0
        %v385 = vunpack.c.h.b16 0
        %vm386 = vcmp.ne.s32.totalorder %v382, %v384
        %vm387 = vcmp.ne.s32.totalorder %v383, %v385
        %vm388 = vmpackc.low %vm387, %vm386
        %v389 = vsel %vm381, %v237, 0
        %v390 = vsel %vm388, %v238, 0
        %v393 = vunpack.c.l.b16 %v389
        %v394 = vunpack.c.h.b16 %v389
        %v395 = vunpack.c.l.b16 %v390
        %v396 = vpack.c.b16 %v393, %v393
        %v397 = vpack.c.b16 %v394, %v394
        %v398 = vpack.c.b16 %v395, %v395
        %399 = vrot.lane.b32.xlu0 %v396, 15
        %v400 = vpop.permute.xlu0 %399
        %401 = vrot.lane.b32.xlu0 %v397, 15
        %v402 = vpop.permute.xlu0 %401
        %403 = vrot.lane.b32.xlu0 %v398, 15
        %v404 = vpop.permute.xlu0 %403
        %vm405 = vcmask 121856
        %v406 = vsel %vm405, %v400, %v402
        %v407 = vsel %vm405, %v402, %v404
        %v409 = vsel %vm279, %v227, 0
        %v412 = vsel %vm283, %v406, 0
        %v415 = vsel %vm283, %v407, 0
        %417 = vmatpush.bf16.msra.mxu0 0
        %418 = vmatpush.bf16.msra.mxu0 0
        %419 = vmatpush.bf16.msra.mxu0 0
        %420 = vmatpush.bf16.msra.mxu0 0
        %421 = vmatpush.bf16.msra.mxu0 0
        %422 = vmatpush.bf16.msra.mxu0 0
        %423 = vmatpush.bf16.msra.mxu0 0
        %424 = vmatpush.bf16.msra.mxu0 %v412
        %425 = vmatmul.bf16.gmra.mxu0 %v409
        %v426 = vpop.f32.mrf.mxu0
        %v427 = vadd.f32 0.0, %v426
        %v428 = vpop.f32.mrf.mxu0
        %429 = vdwg.mxu0
        %430 = vmatpush.bf16.msra.mxu0 0
        %431 = vmatpush.bf16.msra.mxu0 0
        %432 = vmatpush.bf16.msra.mxu0 0
        %433 = vmatpush.bf16.msra.mxu0 0
        %434 = vmatpush.bf16.msra.mxu0 0
        %435 = vmatpush.bf16.msra.mxu0 0
        %436 = vmatpush.bf16.msra.mxu0 0
        %437 = vmatpush.bf16.msra.mxu0 %v415
        %438 = vmatmul.bf16.gmra.mxu0 %v409
        %v439 = vpop.f32.mrf.mxu0
        %v440 = vadd.f32 0.0, %v439
        %v441 = vpop.f32.mrf.mxu0
        %442 = vdwg.mxu0
        %v443 = vadd.f32 %v352, %v427
        %v444 = vadd.f32 %v365, %v440
        %445 = vrot.lane.b32.xlu0 %v240, 127
        %v446 = vpop.permute.xlu0 %445
        %v447 = vrot.slane %v446, 4
        %vm448 = vcmask 1039360
        %v449 = vsel %vm448, %v447, %v446
        %v450 = vunpack.c.l.b16 %v449
        %v451 = vunpack.c.h.b16 %v449
        %v452 = vunpack.c.l.b16 0
        %v453 = vunpack.c.h.b16 0
        %vm454 = vcmp.ne.s32.totalorder %v450, %v452
        %vm455 = vcmp.ne.s32.totalorder %v451, %v453
        %vm456 = vmpackc.low %vm455, %vm454
        %v457 = vunpack.c.l.b16 %v447
        %v458 = vunpack.c.h.b16 %v447
        %v459 = vunpack.c.l.b16 0
        %v460 = vunpack.c.h.b16 0
        %vm461 = vcmp.ne.s32.totalorder %v457, %v459
        %vm462 = vcmp.ne.s32.totalorder %v458, %v460
        %vm463 = vmpackc.low %vm462, %vm461
        %v464 = vsel %vm456, %v237, 0
        %v465 = vsel %vm463, %v238, 0
        %v468 = vunpack.c.l.b16 %v464
        %v469 = vunpack.c.h.b16 %v464
        %v470 = vunpack.c.l.b16 %v465
        %v471 = vpack.c.b16 %v468, %v468
        %v472 = vpack.c.b16 %v469, %v469
        %v473 = vpack.c.b16 %v470, %v470
        %474 = vrot.lane.b32.xlu0 %v471, 1
        %v475 = vpop.permute.xlu0 %474
        %476 = vrot.lane.b32.xlu0 %v472, 1
        %v477 = vpop.permute.xlu0 %476
        %478 = vrot.lane.b32.xlu0 %v473, 1
        %v479 = vpop.permute.xlu0 %478
        %vm480 = vcmask 7168
        %v481 = vsel %vm480, %v475, %v477
        %v482 = vsel %vm480, %v477, %v479
        %v484 = vsel %vm279, %v228, 0
        %v487 = vsel %vm283, %v481, 0
        %v490 = vsel %vm283, %v482, 0
        %492 = vmatpush.bf16.msra.mxu0 0
        %493 = vmatpush.bf16.msra.mxu0 0
        %494 = vmatpush.bf16.msra.mxu0 0
        %495 = vmatpush.bf16.msra.mxu0 0
        %496 = vmatpush.bf16.msra.mxu0 0
        %497 = vmatpush.bf16.msra.mxu0 0
        %498 = vmatpush.bf16.msra.mxu0 0
        %499 = vmatpush.bf16.msra.mxu0 %v487
        %500 = vmatmul.bf16.gmra.mxu0 %v484
        %v501 = vpop.f32.mrf.mxu0
        %v502 = vadd.f32 0.0, %v501
        %v503 = vpop.f32.mrf.mxu0
        %504 = vdwg.mxu0
        %505 = vmatpush.bf16.msra.mxu0 0
        %506 = vmatpush.bf16.msra.mxu0 0
        %507 = vmatpush.bf16.msra.mxu0 0
        %508 = vmatpush.bf16.msra.mxu0 0
        %509 = vmatpush.bf16.msra.mxu0 0
        %510 = vmatpush.bf16.msra.mxu0 0
        %511 = vmatpush.bf16.msra.mxu0 0
        %512 = vmatpush.bf16.msra.mxu0 %v490
        %513 = vmatmul.bf16.gmra.mxu0 %v484
        %v514 = vpop.f32.mrf.mxu0
        %v515 = vadd.f32 0.0, %v514
        %v516 = vpop.f32.mrf.mxu0
        %517 = vdwg.mxu0
        %v518 = vadd.f32 %v443, %v502
        %v519 = vadd.f32 %v444, %v515
        %v520 = vld [vmem:[#allocation2 + $0x4] sm:$0xff]
        %v522 = vunpack.c.l.b16 %v520
        %v523 = vunpack.c.h.b16 %v520
        %v524 = vpack.c.b16 %v522, %v522
        %v525 = vpack.c.b16 %v523, %v523
        %v527 = vsel %vm279, %v229, 0
        %v530 = vsel %vm283, %v524, 0
        %v533 = vsel %vm283, %v525, 0
        %535 = vmatpush.bf16.msra.mxu0 0
        %536 = vmatpush.bf16.msra.mxu0 0
        %537 = vmatpush.bf16.msra.mxu0 0
        %538 = vmatpush.bf16.msra.mxu0 0
        %539 = vmatpush.bf16.msra.mxu0 0
        %540 = vmatpush.bf16.msra.mxu0 0
        %541 = vmatpush.bf16.msra.mxu0 0
        %542 = vmatpush.bf16.msra.mxu0 %v530
        %543 = vmatmul.bf16.gmra.mxu0 %v527
        %v544 = vpop.f32.mrf.mxu0
        %v545 = vadd.f32 0.0, %v544
        %v546 = vpop.f32.mrf.mxu0
        %547 = vdwg.mxu0
        %548 = vmatpush.bf16.msra.mxu0 0
        %549 = vmatpush.bf16.msra.mxu0 0
        %550 = vmatpush.bf16.msra.mxu0 0
        %551 = vmatpush.bf16.msra.mxu0 0
        %552 = vmatpush.bf16.msra.mxu0 0
        %553 = vmatpush.bf16.msra.mxu0 0
        %554 = vmatpush.bf16.msra.mxu0 0
        %555 = vmatpush.bf16.msra.mxu0 %v533
        %556 = vmatmul.bf16.gmra.mxu0 %v527
        %v557 = vpop.f32.mrf.mxu0
        %v558 = vadd.f32 0.0, %v557
        %v559 = vpop.f32.mrf.mxu0
        %560 = vdwg.mxu0
        %v561 = vadd.f32 %v518, %v545
        %v562 = vadd.f32 %v519, %v558
        %v563 = vld [vmem:[#allocation2 + $0x4] sm:$0xff]
        %v564 = vld [vmem:[#allocation2 + $0xc] sm:$0xf]
        %565 = vrot.lane.b32.xlu0 %v369, 1
        %v566 = vpop.permute.xlu0 %565
        %v567 = vrot.slane %v566, 4
        %v568 = vsel %vm480, %v567, %v566
        %v569 = vunpack.c.l.b16 %v568
        %v570 = vunpack.c.h.b16 %v568
        %v571 = vunpack.c.l.b16 0
        %v572 = vunpack.c.h.b16 0
        %vm573 = vcmp.ne.s32.totalorder %v569, %v571
        %vm574 = vcmp.ne.s32.totalorder %v570, %v572
        %vm575 = vmpackc.low %vm574, %vm573
        %v576 = vunpack.c.l.b16 %v567
        %v577 = vunpack.c.h.b16 %v567
        %v578 = vunpack.c.l.b16 0
        %v579 = vunpack.c.h.b16 0
        %vm580 = vcmp.ne.s32.totalorder %v576, %v578
        %vm581 = vcmp.ne.s32.totalorder %v577, %v579
        %vm582 = vmpackc.low %vm581, %vm580
        %v583 = vsel %vm575, %v563, 0
        %v584 = vsel %vm582, %v564, 0
        %v587 = vunpack.c.l.b16 %v583
        %v588 = vunpack.c.h.b16 %v583
        %v589 = vunpack.c.l.b16 %v584
        %v590 = vpack.c.b16 %v587, %v587
        %v591 = vpack.c.b16 %v588, %v588
        %v592 = vpack.c.b16 %v589, %v589
        %593 = vrot.lane.b32.xlu0 %v590, 127
        %v594 = vpop.permute.xlu0 %593
        %595 = vrot.lane.b32.xlu0 %v591, 127
        %v596 = vpop.permute.xlu0 %595
        %597 = vrot.lane.b32.xlu0 %v592, 127
        %v598 = vpop.permute.xlu0 %597
        %v599 = vsel %vm448, %v594, %v596
        %v600 = vsel %vm448, %v596, %v598
        %v602 = vsel %vm279, %v230, 0
        %v605 = vsel %vm283, %v599, 0
        %v608 = vsel %vm283, %v600, 0
        %610 = vmatpush.bf16.msra.mxu0 0
        %611 = vmatpush.bf16.msra.mxu0 0
        %612 = vmatpush.bf16.msra.mxu0 0
        %613 = vmatpush.bf16.msra.mxu0 0
        %614 = vmatpush.bf16.msra.mxu0 0
        %615 = vmatpush.bf16.msra.mxu0 0
        %616 = vmatpush.bf16.msra.mxu0 0
        %617 = vmatpush.bf16.msra.mxu0 %v605
        %618 = vmatmul.bf16.gmra.mxu0 %v602
        %v619 = vpop.f32.mrf.mxu0
        %v620 = vadd.f32 0.0, %v619
        %v621 = vpop.f32.mrf.mxu0
        %622 = vdwg.mxu0
        %623 = vmatpush.bf16.msra.mxu0 0
        %624 = vmatpush.bf16.msra.mxu0 0
        %625 = vmatpush.bf16.msra.mxu0 0
        %626 = vmatpush.bf16.msra.mxu0 0
        %627 = vmatpush.bf16.msra.mxu0 0
        %628 = vmatpush.bf16.msra.mxu0 0
        %629 = vmatpush.bf16.msra.mxu0 0
        %630 = vmatpush.bf16.msra.mxu0 %v608
        %631 = vmatmul.bf16.gmra.mxu0 %v602
        %v632 = vpop.f32.mrf.mxu0
        %v633 = vadd.f32 0.0, %v632
        %v634 = vpop.f32.mrf.mxu0
        %635 = vdwg.mxu0
        %v636 = vadd.f32 %v561, %v620
        %v637 = vadd.f32 %v562, %v633
        %638 = vrot.lane.b32.xlu0 %v240, 15
        %v639 = vpop.permute.xlu0 %638
        %v640 = vrot.slane %v639, 4
        %v641 = vsel %vm405, %v640, %v639
        %v642 = vunpack.c.l.b16 %v641
        %v643 = vunpack.c.h.b16 %v641
        %v644 = vunpack.c.l.b16 0
        %v645 = vunpack.c.h.b16 0
        %vm646 = vcmp.ne.s32.totalorder %v642, %v644
        %vm647 = vcmp.ne.s32.totalorder %v643, %v645
        %vm648 = vmpackc.low %vm647, %vm646
        %v649 = vunpack.c.l.b16 %v640
        %v650 = vunpack.c.h.b16 %v640
        %v651 = vunpack.c.l.b16 0
        %v652 = vunpack.c.h.b16 0
        %vm653 = vcmp.ne.s32.totalorder %v649, %v651
        %vm654 = vcmp.ne.s32.totalorder %v650, %v652
        %vm655 = vmpackc.low %vm654, %vm653
        %v656 = vsel %vm648, %v563, 0
        %v657 = vsel %vm655, %v564, 0
        %v660 = vunpack.c.l.b16 %v656
        %v661 = vunpack.c.h.b16 %v656
        %v662 = vunpack.c.l.b16 %v657
        %v663 = vpack.c.b16 %v660, %v660
        %v664 = vpack.c.b16 %v661, %v661
        %v665 = vpack.c.b16 %v662, %v662
        %666 = vrot.lane.b32.xlu0 %v663, 113
        %v667 = vpop.permute.xlu0 %666
        %668 = vrot.lane.b32.xlu0 %v664, 113
        %v669 = vpop.permute.xlu0 %668
        %670 = vrot.lane.b32.xlu0 %v665, 113
        %v671 = vpop.permute.xlu0 %670
        %v672 = vsel %vm373, %v667, %v669
        %v673 = vsel %vm373, %v669, %v671
        %v675 = vsel %vm279, %v231, 0
        %v678 = vsel %vm283, %v672, 0
        %v681 = vsel %vm283, %v673, 0
        %683 = vmatpush.bf16.msra.mxu0 0
        %684 = vmatpush.bf16.msra.mxu0 0
        %685 = vmatpush.bf16.msra.mxu0 0
        %686 = vmatpush.bf16.msra.mxu0 0
        %687 = vmatpush.bf16.msra.mxu0 0
        %688 = vmatpush.bf16.msra.mxu0 0
        %689 = vmatpush.bf16.msra.mxu0 0
        %690 = vmatpush.bf16.msra.mxu0 %v678
        %691 = vmatmul.bf16.gmra.mxu0 %v675
        %v692 = vpop.f32.mrf.mxu0
        %v693 = vadd.f32 0.0, %v692
        %v694 = vpop.f32.mrf.mxu0
        %695 = vdwg.mxu0
        %696 = vmatpush.bf16.msra.mxu0 0
        %697 = vmatpush.bf16.msra.mxu0 0
        %698 = vmatpush.bf16.msra.mxu0 0
        %699 = vmatpush.bf16.msra.mxu0 0
        %700 = vmatpush.bf16.msra.mxu0 0
        %701 = vmatpush.bf16.msra.mxu0 0
        %702 = vmatpush.bf16.msra.mxu0 0
        %703 = vmatpush.bf16.msra.mxu0 %v681
        %704 = vmatmul.bf16.gmra.mxu0 %v675
        %v705 = vpop.f32.mrf.mxu0
        %v706 = vadd.f32 0.0, %v705
        %v707 = vpop.f32.mrf.mxu0
        %708 = vdwg.mxu0
        %v709 = vadd.f32 %v636, %v693
        %v710 = vadd.f32 %v637, %v706
        %v713 = vunpack.c.l.b16 %v563
        %v714 = vunpack.c.h.b16 %v563
        %v715 = vunpack.c.l.b16 %v564
        %v716 = vpack.c.b16 %v713, %v713
        %v717 = vpack.c.b16 %v714, %v714
        %v718 = vpack.c.b16 %v715, %v715
        %719 = vrot.lane.b32.xlu0 %v716, 112
        %v720 = vpop.permute.xlu0 %719
        %721 = vrot.lane.b32.xlu0 %v717, 112
        %v722 = vpop.permute.xlu0 %721
        %723 = vrot.lane.b32.xlu0 %v718, 112
        %v724 = vpop.permute.xlu0 %723
        %vm725 = vcmask 916480
        %v726 = vsel %vm725, %v720, %v722
        %v727 = vsel %vm725, %v722, %v724
        %v729 = vsel %vm279, %v232, 0
        %v732 = vsel %vm283, %v726, 0
        %v735 = vsel %vm283, %v727, 0
        %737 = vmatpush.bf16.msra.mxu0 0
        %738 = vmatpush.bf16.msra.mxu0 0
        %739 = vmatpush.bf16.msra.mxu0 0
        %740 = vmatpush.bf16.msra.mxu0 0
        %741 = vmatpush.bf16.msra.mxu0 0
        %742 = vmatpush.bf16.msra.mxu0 0
        %743 = vmatpush.bf16.msra.mxu0 0
        %744 = vmatpush.bf16.msra.mxu0 %v732
        %745 = vmatmul.bf16.gmra.mxu0 %v729
        %v746 = vpop.f32.mrf.mxu0
        %v747 = vadd.f32 0.0, %v746
        %v748 = vpop.f32.mrf.mxu0
        %749 = vdwg.mxu0
        %750 = vmatpush.bf16.msra.mxu0 0
        %751 = vmatpush.bf16.msra.mxu0 0
        %752 = vmatpush.bf16.msra.mxu0 0
        %753 = vmatpush.bf16.msra.mxu0 0
        %754 = vmatpush.bf16.msra.mxu0 0
        %755 = vmatpush.bf16.msra.mxu0 0
        %756 = vmatpush.bf16.msra.mxu0 0
        %757 = vmatpush.bf16.msra.mxu0 %v735
        %758 = vmatmul.bf16.gmra.mxu0 %v729
        %v759 = vpop.f32.mrf.mxu0
        %v760 = vadd.f32 0.0, %v759
        %v761 = vpop.f32.mrf.mxu0
        %762 = vdwg.mxu0
        %v763 = vadd.f32 %v709, %v747
        %v764 = vadd.f32 %v710, %v760
        %765 = vrot.lane.b32.xlu0 %v369, 17
        %v766 = vpop.permute.xlu0 %765
        %v767 = vrot.slane %v766, 4
        %v768 = vsel %vm330, %v767, %v766
        %v769 = vunpack.c.l.b16 %v768
        %v770 = vunpack.c.h.b16 %v768
        %v771 = vunpack.c.l.b16 0
        %v772 = vunpack.c.h.b16 0
        %vm773 = vcmp.ne.s32.totalorder %v769, %v771
        %vm774 = vcmp.ne.s32.totalorder %v770, %v772
        %vm775 = vmpackc.low %vm774, %vm773
        %v776 = vunpack.c.l.b16 %v767
        %v777 = vunpack.c.h.b16 %v767
        %v778 = vunpack.c.l.b16 0
        %v779 = vunpack.c.h.b16 0
        %vm780 = vcmp.ne.s32.totalorder %v776, %v778
        %vm781 = vcmp.ne.s32.totalorder %v777, %v779
        %vm782 = vmpackc.low %vm781, %vm780
        %v783 = vsel %vm775, %v563, 0
        %v784 = vsel %vm782, %v564, 0
        %v787 = vunpack.c.l.b16 %v783
        %v788 = vunpack.c.h.b16 %v783
        %v789 = vunpack.c.l.b16 %v784
        %v790 = vpack.c.b16 %v787, %v787
        %v791 = vpack.c.b16 %v788, %v788
        %v792 = vpack.c.b16 %v789, %v789
        %793 = vrot.lane.b32.xlu0 %v790, 111
        %v794 = vpop.permute.xlu0 %793
        %795 = vrot.lane.b32.xlu0 %v791, 111
        %v796 = vpop.permute.xlu0 %795
        %797 = vrot.lane.b32.xlu0 %v792, 111
        %v798 = vpop.permute.xlu0 %797
        %v799 = vsel %vm244, %v794, %v796
        %v800 = vsel %vm244, %v796, %v798
        %v802 = vsel %vm279, %v233, 0
        %v805 = vsel %vm283, %v799, 0
        %v808 = vsel %vm283, %v800, 0
        %810 = vmatpush.bf16.msra.mxu0 0
        %811 = vmatpush.bf16.msra.mxu0 0
        %812 = vmatpush.bf16.msra.mxu0 0
        %813 = vmatpush.bf16.msra.mxu0 0
        %814 = vmatpush.bf16.msra.mxu0 0
        %815 = vmatpush.bf16.msra.mxu0 0
        %816 = vmatpush.bf16.msra.mxu0 0
        %817 = vmatpush.bf16.msra.mxu0 %v805
        %818 = vmatmul.bf16.gmra.mxu0 %v802
        %v819 = vpop.f32.mrf.mxu0
        %v820 = vadd.f32 0.0, %v819
        %v821 = vpop.f32.mrf.mxu0
        %822 = vdwg.mxu0
        %823 = vmatpush.bf16.msra.mxu0 0
        %824 = vmatpush.bf16.msra.mxu0 0
        %825 = vmatpush.bf16.msra.mxu0 0
        %826 = vmatpush.bf16.msra.mxu0 0
        %827 = vmatpush.bf16.msra.mxu0 0
        %828 = vmatpush.bf16.msra.mxu0 0
        %829 = vmatpush.bf16.msra.mxu0 0
        %830 = vmatpush.bf16.msra.mxu0 %v808
        %831 = vmatmul.bf16.gmra.mxu0 %v802
        %v832 = vpop.f32.mrf.mxu0
        %v833 = vadd.f32 0.0, %v832
        %v834 = vpop.f32.mrf.mxu0
        %835 = vdwg.mxu0
        %v836 = vadd.f32 %v763, %v820
        %v837 = vadd.f32 %v764, %v833
        %839 = vset.pattern.permute.xlu0 0
        %840 = vperm.xlu0 %839, %v236
        %v841 = vpop.permute.xlu0 %840
        %v843 = vadd.f32 %v836, %v841
        %v844 = vadd.f32 %v837, %v841
        %v845 = vmax.f32 %v843, 0.0
        %v846 = vmax.f32 %v844, 0.0
        %v847 = vpack.c.bf16 %v846, %v845
        %848 = vst [vmem:[#allocation2 + $0x4] sm:$0xff] %v847
        %s849 = sadd.s32 %s221, 1
        %s850 = smul.u32 %s849, 9
        %s851 = smul.addr %s850, 4
        %s852 = scalar_lea.vmem %s1, %s851
        %v853 = vld [vmem:[%s852] sm:$0xf]
        %v854 = vld [vmem:[%s852 + $0x4] sm:$0xf]
        %v855 = vld [vmem:[%s852 + $0x8] sm:$0xf]
        %v856 = vld [vmem:[%s852 + $0xc] sm:$0xf]
        %v857 = vld [vmem:[%s852 + $0x10] sm:$0xf]
        %v858 = vld [vmem:[%s852 + $0x14] sm:$0xf]
        %v859 = vld [vmem:[%s852 + $0x18] sm:$0xf]
        %v860 = vld [vmem:[%s852 + $0x1c] sm:$0xf]
        %v861 = vld [vmem:[%s852 + $0x20] sm:$0xf]
        %s862 = smul.u32 %s849, 8
        %s863 = scalar_lea.vmem %s2, %s862
        %v864 = vld [vmem:[%s863] sm:$0xff]
        %v865 = vld [vmem:[#allocation2] sm:$0xff]
        %v866 = vld [vmem:[#allocation2 + $0x8] sm:$0xf]
        %v867 = vsel %vm252, %v865, 0
        %v868 = vsel %vm259, %v866, 0
        %v871 = vunpack.c.l.b16 %v865
        %v872 = vunpack.c.h.b16 %v865
        %v873 = vunpack.c.l.b16 %v866
        %v874 = vpack.c.b16 %v871, %v871
        %v875 = vpack.c.b16 %v872, %v872
        %v876 = vpack.c.b16 %v873, %v873
        %877 = vrot.lane.b32.xlu0 %v874, 16
        %v878 = vpop.permute.xlu0 %877
        %879 = vrot.lane.b32.xlu0 %v875, 16
        %v880 = vpop.permute.xlu0 %879
        %881 = vrot.lane.b32.xlu0 %v876, 16
        %v882 = vpop.permute.xlu0 %881
        %v883 = vsel %vm276, %v878, %v880
        %v884 = vsel %vm276, %v880, %v882
        %v886 = vsel %vm279, %v854, 0
        %v889 = vsel %vm283, %v883, 0
        %v892 = vsel %vm283, %v884, 0
        %894 = vmatpush.bf16.msra.mxu0 0
        %895 = vmatpush.bf16.msra.mxu0 0
        %896 = vmatpush.bf16.msra.mxu0 0
        %897 = vmatpush.bf16.msra.mxu0 0
        %898 = vmatpush.bf16.msra.mxu0 0
        %899 = vmatpush.bf16.msra.mxu0 0
        %900 = vmatpush.bf16.msra.mxu0 0
        %901 = vmatpush.bf16.msra.mxu0 %v889
        %902 = vmatmul.bf16.gmra.mxu0 %v886
        %v903 = vpop.f32.mrf.mxu0
        %v904 = vadd.f32 0.0, %v903
        %v905 = vpop.f32.mrf.mxu0
        %906 = vdwg.mxu0
        %907 = vmatpush.bf16.msra.mxu0 0
        %908 = vmatpush.bf16.msra.mxu0 0
        %909 = vmatpush.bf16.msra.mxu0 0
        %910 = vmatpush.bf16.msra.mxu0 0
        %911 = vmatpush.bf16.msra.mxu0 0
        %912 = vmatpush.bf16.msra.mxu0 0
        %913 = vmatpush.bf16.msra.mxu0 0
        %914 = vmatpush.bf16.msra.mxu0 %v892
        %915 = vmatmul.bf16.gmra.mxu0 %v886
        %v916 = vpop.f32.mrf.mxu0
        %v917 = vadd.f32 0.0, %v916
        %v918 = vpop.f32.mrf.mxu0
        %919 = vdwg.mxu0
        %v922 = vunpack.c.l.b16 %v867
        %v923 = vunpack.c.h.b16 %v867
        %v924 = vunpack.c.l.b16 %v868
        %v925 = vpack.c.b16 %v922, %v922
        %v926 = vpack.c.b16 %v923, %v923
        %v927 = vpack.c.b16 %v924, %v924
        %928 = vrot.lane.b32.xlu0 %v925, 17
        %v929 = vpop.permute.xlu0 %928
        %930 = vrot.lane.b32.xlu0 %v926, 17
        %v931 = vpop.permute.xlu0 %930
        %932 = vrot.lane.b32.xlu0 %v927, 17
        %v933 = vpop.permute.xlu0 %932
        %v934 = vsel %vm330, %v929, %v931
        %v935 = vsel %vm330, %v931, %v933
        %v937 = vsel %vm279, %v853, 0
        %v940 = vsel %vm283, %v934, 0
        %v943 = vsel %vm283, %v935, 0
        %945 = vmatpush.bf16.msra.mxu0 0
        %946 = vmatpush.bf16.msra.mxu0 0
        %947 = vmatpush.bf16.msra.mxu0 0
        %948 = vmatpush.bf16.msra.mxu0 0
        %949 = vmatpush.bf16.msra.mxu0 0
        %950 = vmatpush.bf16.msra.mxu0 0
        %951 = vmatpush.bf16.msra.mxu0 0
        %952 = vmatpush.bf16.msra.mxu0 %v940
        %953 = vmatmul.bf16.gmra.mxu0 %v937
        %v954 = vpop.f32.mrf.mxu0
        %v955 = vadd.f32 %v904, %v954
        %v956 = vpop.f32.mrf.mxu0
        %957 = vdwg.mxu0
        %958 = vmatpush.bf16.msra.mxu0 0
        %959 = vmatpush.bf16.msra.mxu0 0
        %960 = vmatpush.bf16.msra.mxu0 0
        %961 = vmatpush.bf16.msra.mxu0 0
        %962 = vmatpush.bf16.msra.mxu0 0
        %963 = vmatpush.bf16.msra.mxu0 0
        %964 = vmatpush.bf16.msra.mxu0 0
        %965 = vmatpush.bf16.msra.mxu0 %v943
        %966 = vmatmul.bf16.gmra.mxu0 %v937
        %v967 = vpop.f32.mrf.mxu0
        %v968 = vadd.f32 %v917, %v967
        %v969 = vpop.f32.mrf.mxu0
        %970 = vdwg.mxu0
        %v971 = vsel %vm381, %v865, 0
        %v972 = vsel %vm388, %v866, 0
        %v975 = vunpack.c.l.b16 %v971
        %v976 = vunpack.c.h.b16 %v971
        %v977 = vunpack.c.l.b16 %v972
        %v978 = vpack.c.b16 %v975, %v975
        %v979 = vpack.c.b16 %v976, %v976
        %v980 = vpack.c.b16 %v977, %v977
        %981 = vrot.lane.b32.xlu0 %v978, 15
        %v982 = vpop.permute.xlu0 %981
        %983 = vrot.lane.b32.xlu0 %v979, 15
        %v984 = vpop.permute.xlu0 %983
        %985 = vrot.lane.b32.xlu0 %v980, 15
        %v986 = vpop.permute.xlu0 %985
        %v987 = vsel %vm405, %v982, %v984
        %v988 = vsel %vm405, %v984, %v986
        %v990 = vsel %vm279, %v855, 0
        %v993 = vsel %vm283, %v987, 0
        %v996 = vsel %vm283, %v988, 0
        %998 = vmatpush.bf16.msra.mxu0 0
        %999 = vmatpush.bf16.msra.mxu0 0
        %1000 = vmatpush.bf16.msra.mxu0 0
        %1001 = vmatpush.bf16.msra.mxu0 0
        %1002 = vmatpush.bf16.msra.mxu0 0
        %1003 = vmatpush.bf16.msra.mxu0 0
        %1004 = vmatpush.bf16.msra.mxu0 0
        %1005 = vmatpush.bf16.msra.mxu0 %v993
        %1006 = vmatmul.bf16.gmra.mxu0 %v990
        %v1007 = vpop.f32.mrf.mxu0
        %v1008 = vadd.f32 0.0, %v1007
        %v1009 = vpop.f32.mrf.mxu0
        %1010 = vdwg.mxu0
        %1011 = vmatpush.bf16.msra.mxu0 0
        %1012 = vmatpush.bf16.msra.mxu0 0
        %1013 = vmatpush.bf16.msra.mxu0 0
        %1014 = vmatpush.bf16.msra.mxu0 0
        %1015 = vmatpush.bf16.msra.mxu0 0
        %1016 = vmatpush.bf16.msra.mxu0 0
        %1017 = vmatpush.bf16.msra.mxu0 0
        %1018 = vmatpush.bf16.msra.mxu0 %v996
        %1019 = vmatmul.bf16.gmra.mxu0 %v990
        %v1020 = vpop.f32.mrf.mxu0
        %v1021 = vadd.f32 0.0, %v1020
        %v1022 = vpop.f32.mrf.mxu0
        %1023 = vdwg.mxu0
        %v1024 = vadd.f32 %v955, %v1008
        %v1025 = vadd.f32 %v968, %v1021
        %v1026 = vsel %vm456, %v865, 0
        %v1027 = vsel %vm463, %v866, 0
        %v1030 = vunpack.c.l.b16 %v1026
        %v1031 = vunpack.c.h.b16 %v1026
        %v1032 = vunpack.c.l.b16 %v1027
        %v1033 = vpack.c.b16 %v1030, %v1030
        %v1034 = vpack.c.b16 %v1031, %v1031
        %v1035 = vpack.c.b16 %v1032, %v1032
        %1036 = vrot.lane.b32.xlu0 %v1033, 1
        %v1037 = vpop.permute.xlu0 %1036
        %1038 = vrot.lane.b32.xlu0 %v1034, 1
        %v1039 = vpop.permute.xlu0 %1038
        %1040 = vrot.lane.b32.xlu0 %v1035, 1
        %v1041 = vpop.permute.xlu0 %1040
        %v1042 = vsel %vm480, %v1037, %v1039
        %v1043 = vsel %vm480, %v1039, %v1041
        %v1045 = vsel %vm279, %v856, 0
        %v1048 = vsel %vm283, %v1042, 0
        %v1051 = vsel %vm283, %v1043, 0
        %1053 = vmatpush.bf16.msra.mxu0 0
        %1054 = vmatpush.bf16.msra.mxu0 0
        %1055 = vmatpush.bf16.msra.mxu0 0
        %1056 = vmatpush.bf16.msra.mxu0 0
        %1057 = vmatpush.bf16.msra.mxu0 0
        %1058 = vmatpush.bf16.msra.mxu0 0
        %1059 = vmatpush.bf16.msra.mxu0 0
        %1060 = vmatpush.bf16.msra.mxu0 %v1048
        %1061 = vmatmul.bf16.gmra.mxu0 %v1045
        %v1062 = vpop.f32.mrf.mxu0
        %v1063 = vadd.f32 0.0, %v1062
        %v1064 = vpop.f32.mrf.mxu0
        %1065 = vdwg.mxu0
        %1066 = vmatpush.bf16.msra.mxu0 0
        %1067 = vmatpush.bf16.msra.mxu0 0
        %1068 = vmatpush.bf16.msra.mxu0 0
        %1069 = vmatpush.bf16.msra.mxu0 0
        %1070 = vmatpush.bf16.msra.mxu0 0
        %1071 = vmatpush.bf16.msra.mxu0 0
        %1072 = vmatpush.bf16.msra.mxu0 0
        %1073 = vmatpush.bf16.msra.mxu0 %v1051
        %1074 = vmatmul.bf16.gmra.mxu0 %v1045
        %v1075 = vpop.f32.mrf.mxu0
        %v1076 = vadd.f32 0.0, %v1075
        %v1077 = vpop.f32.mrf.mxu0
        %1078 = vdwg.mxu0
        %v1079 = vadd.f32 %v1024, %v1063
        %v1080 = vadd.f32 %v1025, %v1076
        %v1081 = vld [vmem:[#allocation2 + $0x4] sm:$0xff]
        %v1083 = vunpack.c.l.b16 %v1081
        %v1084 = vunpack.c.h.b16 %v1081
        %v1085 = vpack.c.b16 %v1083, %v1083
        %v1086 = vpack.c.b16 %v1084, %v1084
        %v1088 = vsel %vm279, %v857, 0
        %v1091 = vsel %vm283, %v1085, 0
        %v1094 = vsel %vm283, %v1086, 0
        %1096 = vmatpush.bf16.msra.mxu0 0
        %1097 = vmatpush.bf16.msra.mxu0 0
        %1098 = vmatpush.bf16.msra.mxu0 0
        %1099 = vmatpush.bf16.msra.mxu0 0
        %1100 = vmatpush.bf16.msra.mxu0 0
        %1101 = vmatpush.bf16.msra.mxu0 0
        %1102 = vmatpush.bf16.msra.mxu0 0
        %1103 = vmatpush.bf16.msra.mxu0 %v1091
        %1104 = vmatmul.bf16.gmra.mxu0 %v1088
        %v1105 = vpop.f32.mrf.mxu0
        %v1106 = vadd.f32 0.0, %v1105
        %v1107 = vpop.f32.mrf.mxu0
        %1108 = vdwg.mxu0
        %1109 = vmatpush.bf16.msra.mxu0 0
        %1110 = vmatpush.bf16.msra.mxu0 0
        %1111 = vmatpush.bf16.msra.mxu0 0
        %1112 = vmatpush.bf16.msra.mxu0 0
        %1113 = vmatpush.bf16.msra.mxu0 0
        %1114 = vmatpush.bf16.msra.mxu0 0
        %1115 = vmatpush.bf16.msra.mxu0 0
        %1116 = vmatpush.bf16.msra.mxu0 %v1094
        %1117 = vmatmul.bf16.gmra.mxu0 %v1088
        %v1118 = vpop.f32.mrf.mxu0
        %v1119 = vadd.f32 0.0, %v1118
        %v1120 = vpop.f32.mrf.mxu0
        %1121 = vdwg.mxu0
        %v1122 = vadd.f32 %v1079, %v1106
        %v1123 = vadd.f32 %v1080, %v1119
        %v1124 = vld [vmem:[#allocation2 + $0x4] sm:$0xff]
        %v1125 = vld [vmem:[#allocation2 + $0xc] sm:$0xf]
        %v1126 = vsel %vm575, %v1124, 0
        %v1127 = vsel %vm582, %v1125, 0
        %v1130 = vunpack.c.l.b16 %v1126
        %v1131 = vunpack.c.h.b16 %v1126
        %v1132 = vunpack.c.l.b16 %v1127
        %v1133 = vpack.c.b16 %v1130, %v1130
        %v1134 = vpack.c.b16 %v1131, %v1131
        %v1135 = vpack.c.b16 %v1132, %v1132
        %1136 = vrot.lane.b32.xlu0 %v1133, 127
        %v1137 = vpop.permute.xlu0 %1136
        %1138 = vrot.lane.b32.xlu0 %v1134, 127
        %v1139 = vpop.permute.xlu0 %1138
        %1140 = vrot.lane.b32.xlu0 %v1135, 127
        %v1141 = vpop.permute.xlu0 %1140
        %v1142 = vsel %vm448, %v1137, %v1139
        %v1143 = vsel %vm448, %v1139, %v1141
        %v1145 = vsel %vm279, %v858, 0
        %v1148 = vsel %vm283, %v1142, 0
        %v1151 = vsel %vm283, %v1143, 0
        %1153 = vmatpush.bf16.msra.mxu0 0
        %1154 = vmatpush.bf16.msra.mxu0 0
        %1155 = vmatpush.bf16.msra.mxu0 0
        %1156 = vmatpush.bf16.msra.mxu0 0
        %1157 = vmatpush.bf16.msra.mxu0 0
        %1158 = vmatpush.bf16.msra.mxu0 0
        %1159 = vmatpush.bf16.msra.mxu0 0
        %1160 = vmatpush.bf16.msra.mxu0 %v1148
        %1161 = vmatmul.bf16.gmra.mxu0 %v1145
        %v1162 = vpop.f32.mrf.mxu0
        %v1163 = vadd.f32 0.0, %v1162
        %v1164 = vpop.f32.mrf.mxu0
        %1165 = vdwg.mxu0
        %1166 = vmatpush.bf16.msra.mxu0 0
        %1167 = vmatpush.bf16.msra.mxu0 0
        %1168 = vmatpush.bf16.msra.mxu0 0
        %1169 = vmatpush.bf16.msra.mxu0 0
        %1170 = vmatpush.bf16.msra.mxu0 0
        %1171 = vmatpush.bf16.msra.mxu0 0
        %1172 = vmatpush.bf16.msra.mxu0 0
        %1173 = vmatpush.bf16.msra.mxu0 %v1151
        %1174 = vmatmul.bf16.gmra.mxu0 %v1145
        %v1175 = vpop.f32.mrf.mxu0
        %v1176 = vadd.f32 0.0, %v1175
        %v1177 = vpop.f32.mrf.mxu0
        %1178 = vdwg.mxu0
        %v1179 = vadd.f32 %v1122, %v1163
        %v1180 = vadd.f32 %v1123, %v1176
        %v1181 = vsel %vm648, %v1124, 0
        %v1182 = vsel %vm655, %v1125, 0
        %v1185 = vunpack.c.l.b16 %v1181
        %v1186 = vunpack.c.h.b16 %v1181
        %v1187 = vunpack.c.l.b16 %v1182
        %v1188 = vpack.c.b16 %v1185, %v1185
        %v1189 = vpack.c.b16 %v1186, %v1186
        %v1190 = vpack.c.b16 %v1187, %v1187
        %1191 = vrot.lane.b32.xlu0 %v1188, 113
        %v1192 = vpop.permute.xlu0 %1191
        %1193 = vrot.lane.b32.xlu0 %v1189, 113
        %v1194 = vpop.permute.xlu0 %1193
        %1195 = vrot.lane.b32.xlu0 %v1190, 113
        %v1196 = vpop.permute.xlu0 %1195
        %v1197 = vsel %vm373, %v1192, %v1194
        %v1198 = vsel %vm373, %v1194, %v1196
        %v1200 = vsel %vm279, %v859, 0
        %v1203 = vsel %vm283, %v1197, 0
        %v1206 = vsel %vm283, %v1198, 0
        %1208 = vmatpush.bf16.msra.mxu0 0
        %1209 = vmatpush.bf16.msra.mxu0 0
        %1210 = vmatpush.bf16.msra.mxu0 0
        %1211 = vmatpush.bf16.msra.mxu0 0
        %1212 = vmatpush.bf16.msra.mxu0 0
        %1213 = vmatpush.bf16.msra.mxu0 0
        %1214 = vmatpush.bf16.msra.mxu0 0
        %1215 = vmatpush.bf16.msra.mxu0 %v1203
        %1216 = vmatmul.bf16.gmra.mxu0 %v1200
        %v1217 = vpop.f32.mrf.mxu0
        %v1218 = vadd.f32 0.0, %v1217
        %v1219 = vpop.f32.mrf.mxu0
        %1220 = vdwg.mxu0
        %1221 = vmatpush.bf16.msra.mxu0 0
        %1222 = vmatpush.bf16.msra.mxu0 0
        %1223 = vmatpush.bf16.msra.mxu0 0
        %1224 = vmatpush.bf16.msra.mxu0 0
        %1225 = vmatpush.bf16.msra.mxu0 0
        %1226 = vmatpush.bf16.msra.mxu0 0
        %1227 = vmatpush.bf16.msra.mxu0 0
        %1228 = vmatpush.bf16.msra.mxu0 %v1206
        %1229 = vmatmul.bf16.gmra.mxu0 %v1200
        %v1230 = vpop.f32.mrf.mxu0
        %v1231 = vadd.f32 0.0, %v1230
        %v1232 = vpop.f32.mrf.mxu0
        %1233 = vdwg.mxu0
        %v1234 = vadd.f32 %v1179, %v1218
        %v1235 = vadd.f32 %v1180, %v1231
        %v1238 = vunpack.c.l.b16 %v1124
        %v1239 = vunpack.c.h.b16 %v1124
        %v1240 = vunpack.c.l.b16 %v1125
        %v1241 = vpack.c.b16 %v1238, %v1238
        %v1242 = vpack.c.b16 %v1239, %v1239
        %v1243 = vpack.c.b16 %v1240, %v1240
        %1244 = vrot.lane.b32.xlu0 %v1241, 112
        %v1245 = vpop.permute.xlu0 %1244
        %1246 = vrot.lane.b32.xlu0 %v1242, 112
        %v1247 = vpop.permute.xlu0 %1246
        %1248 = vrot.lane.b32.xlu0 %v1243, 112
        %v1249 = vpop.permute.xlu0 %1248
        %v1250 = vsel %vm725, %v1245, %v1247
        %v1251 = vsel %vm725, %v1247, %v1249
        %v1253 = vsel %vm279, %v860, 0
        %v1256 = vsel %vm283, %v1250, 0
        %v1259 = vsel %vm283, %v1251, 0
        %1261 = vmatpush.bf16.msra.mxu0 0
        %1262 = vmatpush.bf16.msra.mxu0 0
        %1263 = vmatpush.bf16.msra.mxu0 0
        %1264 = vmatpush.bf16.msra.mxu0 0
        %1265 = vmatpush.bf16.msra.mxu0 0
        %1266 = vmatpush.bf16.msra.mxu0 0
        %1267 = vmatpush.bf16.msra.mxu0 0
        %1268 = vmatpush.bf16.msra.mxu0 %v1256
        %1269 = vmatmul.bf16.gmra.mxu0 %v1253
        %v1270 = vpop.f32.mrf.mxu0
        %v1271 = vadd.f32 0.0, %v1270
        %v1272 = vpop.f32.mrf.mxu0
        %1273 = vdwg.mxu0
        %1274 = vmatpush.bf16.msra.mxu0 0
        %1275 = vmatpush.bf16.msra.mxu0 0
        %1276 = vmatpush.bf16.msra.mxu0 0
        %1277 = vmatpush.bf16.msra.mxu0 0
        %1278 = vmatpush.bf16.msra.mxu0 0
        %1279 = vmatpush.bf16.msra.mxu0 0
        %1280 = vmatpush.bf16.msra.mxu0 0
        %1281 = vmatpush.bf16.msra.mxu0 %v1259
        %1282 = vmatmul.bf16.gmra.mxu0 %v1253
        %v1283 = vpop.f32.mrf.mxu0
        %v1284 = vadd.f32 0.0, %v1283
        %v1285 = vpop.f32.mrf.mxu0
        %1286 = vdwg.mxu0
        %v1287 = vadd.f32 %v1234, %v1271
        %v1288 = vadd.f32 %v1235, %v1284
        %v1289 = vsel %vm775, %v1124, 0
        %v1290 = vsel %vm782, %v1125, 0
        %v1293 = vunpack.c.l.b16 %v1289
        %v1294 = vunpack.c.h.b16 %v1289
        %v1295 = vunpack.c.l.b16 %v1290
        %v1296 = vpack.c.b16 %v1293, %v1293
        %v1297 = vpack.c.b16 %v1294, %v1294
        %v1298 = vpack.c.b16 %v1295, %v1295
        %1299 = vrot.lane.b32.xlu0 %v1296, 111
        %v1300 = vpop.permute.xlu0 %1299
        %1301 = vrot.lane.b32.xlu0 %v1297, 111
        %v1302 = vpop.permute.xlu0 %1301
        %1303 = vrot.lane.b32.xlu0 %v1298, 111
        %v1304 = vpop.permute.xlu0 %1303
        %v1305 = vsel %vm244, %v1300, %v1302
        %v1306 = vsel %vm244, %v1302, %v1304
        %v1308 = vsel %vm279, %v861, 0
        %v1311 = vsel %vm283, %v1305, 0
        %v1314 = vsel %vm283, %v1306, 0
        %1316 = vmatpush.bf16.msra.mxu0 0
        %1317 = vmatpush.bf16.msra.mxu0 0
        %1318 = vmatpush.bf16.msra.mxu0 0
        %1319 = vmatpush.bf16.msra.mxu0 0
        %1320 = vmatpush.bf16.msra.mxu0 0
        %1321 = vmatpush.bf16.msra.mxu0 0
        %1322 = vmatpush.bf16.msra.mxu0 0
        %1323 = vmatpush.bf16.msra.mxu0 %v1311
        %1324 = vmatmul.bf16.gmra.mxu0 %v1308
        %v1325 = vpop.f32.mrf.mxu0
        %v1326 = vadd.f32 0.0, %v1325
        %v1327 = vpop.f32.mrf.mxu0
        %1328 = vdwg.mxu0
        %1329 = vmatpush.bf16.msra.mxu0 0
        %1330 = vmatpush.bf16.msra.mxu0 0
        %1331 = vmatpush.bf16.msra.mxu0 0
        %1332 = vmatpush.bf16.msra.mxu0 0
        %1333 = vmatpush.bf16.msra.mxu0 0
        %1334 = vmatpush.bf16.msra.mxu0 0
        %1335 = vmatpush.bf16.msra.mxu0 0
        %1336 = vmatpush.bf16.msra.mxu0 %v1314
        %1337 = vmatmul.bf16.gmra.mxu0 %v1308
        %v1338 = vpop.f32.mrf.mxu0
        %v1339 = vadd.f32 0.0, %v1338
        %v1340 = vpop.f32.mrf.mxu0
        %1341 = vdwg.mxu0
        %v1342 = vadd.f32 %v1287, %v1326
        %v1343 = vadd.f32 %v1288, %v1339
        %1345 = vset.pattern.permute.xlu0 0
        %1346 = vperm.xlu0 %1345, %v864
        %v1347 = vpop.permute.xlu0 %1346
        %v1349 = vadd.f32 %v1342, %v1347
        %v1350 = vadd.f32 %v1343, %v1347
        %v1351 = vld [vmem:[#allocation3] sm:$0xff]
        %v1352 = vld [vmem:[#allocation3 + $0x8] sm:$0xff]
        %v1353 = vadd.f32 %v1349, %v1351
        %v1354 = vadd.f32 %v1350, %v1352
        %1355 = vst [vmem:[#allocation3] sm:$0xff] %v1353
        %1356 = vst [vmem:[#allocation3 + $0x8] sm:$0xff] %v1354
        %v1357 = vpack.c.bf16 %v1354, %v1353
        %1358 = vst [vmem:[#allocation2 + $0x4] sm:$0xff] %v1357
      $region37: #{residual_group_forward.1} parent=31 // loop_footer
        %s220 = sadd.s32 1, %s216
      $region38: #{residual_group_forward.1} parent=31 // loop_footer_branch
        %215 = sbr.rel target = $region34
      $region39: #{residual_group_forward.1} parent=31 // loop_exit
        _
      %s1359 = scalar_lea.vmem %s1, 144
      %v1360 = vld [vmem:[%s1359] sm:$0xf]
      %v1361 = vld [vmem:[%s1359 + $0x4] sm:$0xf]
      %v1362 = vld [vmem:[%s1359 + $0x8] sm:$0xf]
      %v1363 = vld [vmem:[%s1359 + $0xc] sm:$0xf]
      %v1364 = vld [vmem:[%s1359 + $0x10] sm:$0xf]
      %v1365 = vld [vmem:[%s1359 + $0x14] sm:$0xf]
      %v1366 = vld [vmem:[%s1359 + $0x18] sm:$0xf]
      %v1367 = vld [vmem:[%s1359 + $0x1c] sm:$0xf]
      %v1368 = vld [vmem:[%s1359 + $0x20] sm:$0xf]
      %s1369 = scalar_lea.vmem %s2, 32
      %v1370 = vld [vmem:[%s1369] sm:$0xff]
      %v1371 = vld [vmem:[#allocation2] sm:$0xff]
      %v1372 = vld [vmem:[#allocation2 + $0x8] sm:$0xf]
      %vm1373 = vmpackc.low %vm212, %vm211
      %v1374 = vsel %vm1373, 65537, 0
      %1375 = vrot.lane.b32.xlu0 %v1374, 111
      %v1376 = vpop.permute.xlu0 %1375
      %v1377 = vrot.slane %v1376, 4
      %vm1378 = vcmask 908288
      %v1379 = vsel %vm1378, %v1377, %v1376
      %v1380 = vunpack.c.l.b16 %v1379
      %v1381 = vunpack.c.h.b16 %v1379
      %v1382 = vunpack.c.l.b16 0
      %v1383 = vunpack.c.h.b16 0
      %vm1384 = vcmp.ne.s32.totalorder %v1380, %v1382
      %vm1385 = vcmp.ne.s32.totalorder %v1381, %v1383
      %vm1386 = vmpackc.low %vm1385, %vm1384
      %v1387 = vunpack.c.l.b16 %v1377
      %v1388 = vunpack.c.h.b16 %v1377
      %v1389 = vunpack.c.l.b16 0
      %v1390 = vunpack.c.h.b16 0
      %vm1391 = vcmp.ne.s32.totalorder %v1387, %v1389
      %vm1392 = vcmp.ne.s32.totalorder %v1388, %v1390
      %vm1393 = vmpackc.low %vm1392, %vm1391
      %v1394 = vsel %vm1386, %v1371, 0
      %v1395 = vsel %vm1393, %v1372, 0
      %v1398 = vunpack.c.l.b16 %v1371
      %v1399 = vunpack.c.h.b16 %v1371
      %v1400 = vunpack.c.l.b16 %v1372
      %v1401 = vpack.c.b16 %v1398, %v1398
      %v1402 = vpack.c.b16 %v1399, %v1399
      %v1403 = vpack.c.b16 %v1400, %v1400
      %1404 = vrot.lane.b32.xlu0 %v1401, 16
      %v1405 = vpop.permute.xlu0 %1404
      %1406 = vrot.lane.b32.xlu0 %v1402, 16
      %v1407 = vpop.permute.xlu0 %1406
      %1408 = vrot.lane.b32.xlu0 %v1403, 16
      %v1409 = vpop.permute.xlu0 %1408
      %vm1410 = vcmask 130048
      %v1411 = vsel %vm1410, %v1405, %v1407
      %v1412 = vsel %vm1410, %v1407, %v1409
      %vm1413 = vcmask 64512
      %v1415 = vsel %vm1413, %v1361, 0
      %vm1417 = vcmask 1043456
      %v1419 = vsel %vm1417, %v1411, 0
      %v1422 = vsel %vm1417, %v1412, 0
      %1424 = vmatpush.bf16.msra.mxu0 0
      %1425 = vmatpush.bf16.msra.mxu0 0
      %1426 = vmatpush.bf16.msra.mxu0 0
      %1427 = vmatpush.bf16.msra.mxu0 0
      %1428 = vmatpush.bf16.msra.mxu0 0
      %1429 = vmatpush.bf16.msra.mxu0 0
      %1430 = vmatpush.bf16.msra.mxu0 0
      %1431 = vmatpush.bf16.msra.mxu0 %v1419
      %1432 = vmatmul.bf16.gmra.mxu0 %v1415
      %v1433 = vpop.f32.mrf.mxu0
      %v1434 = vadd.f32 0.0, %v1433
      %v1435 = vpop.f32.mrf.mxu0
      %1436 = vdwg.mxu0
      %1437 = vmatpush.bf16.msra.mxu0 0
      %1438 = vmatpush.bf16.msra.mxu0 0
      %1439 = vmatpush.bf16.msra.mxu0 0
      %1440 = vmatpush.bf16.msra.mxu0 0
      %1441 = vmatpush.bf16.msra.mxu0 0
      %1442 = vmatpush.bf16.msra.mxu0 0
      %1443 = vmatpush.bf16.msra.mxu0 0
      %1444 = vmatpush.bf16.msra.mxu0 %v1422
      %1445 = vmatmul.bf16.gmra.mxu0 %v1415
      %v1446 = vpop.f32.mrf.mxu0
      %v1447 = vadd.f32 0.0, %v1446
      %v1448 = vpop.f32.mrf.mxu0
      %1449 = vdwg.mxu0
      %v1452 = vunpack.c.l.b16 %v1394
      %v1453 = vunpack.c.h.b16 %v1394
      %v1454 = vunpack.c.l.b16 %v1395
      %v1455 = vpack.c.b16 %v1452, %v1452
      %v1456 = vpack.c.b16 %v1453, %v1453
      %v1457 = vpack.c.b16 %v1454, %v1454
      %1458 = vrot.lane.b32.xlu0 %v1455, 17
      %v1459 = vpop.permute.xlu0 %1458
      %1460 = vrot.lane.b32.xlu0 %v1456, 17
      %v1461 = vpop.permute.xlu0 %1460
      %1462 = vrot.lane.b32.xlu0 %v1457, 17
      %v1463 = vpop.permute.xlu0 %1462
      %vm1464 = vcmask 138240
      %v1465 = vsel %vm1464, %v1459, %v1461
      %v1466 = vsel %vm1464, %v1461, %v1463
      %v1468 = vsel %vm1413, %v1360, 0
      %v1471 = vsel %vm1417, %v1465, 0
      %v1474 = vsel %vm1417, %v1466, 0
      %1476 = vmatpush.bf16.msra.mxu0 0
      %1477 = vmatpush.bf16.msra.mxu0 0
      %1478 = vmatpush.bf16.msra.mxu0 0
      %1479 = vmatpush.bf16.msra.mxu0 0
      %1480 = vmatpush.bf16.msra.mxu0 0
      %1481 = vmatpush.bf16.msra.mxu0 0
      %1482 = vmatpush.bf16.msra.mxu0 0
      %1483 = vmatpush.bf16.msra.mxu0 %v1471
      %1484 = vmatmul.bf16.gmra.mxu0 %v1468
      %v1485 = vpop.f32.mrf.mxu0
      %v1486 = vadd.f32 %v1434, %v1485
      %v1487 = vpop.f32.mrf.mxu0
      %1488 = vdwg.mxu0
      %1489 = vmatpush.bf16.msra.mxu0 0
      %1490 = vmatpush.bf16.msra.mxu0 0
      %1491 = vmatpush.bf16.msra.mxu0 0
      %1492 = vmatpush.bf16.msra.mxu0 0
      %1493 = vmatpush.bf16.msra.mxu0 0
      %1494 = vmatpush.bf16.msra.mxu0 0
      %1495 = vmatpush.bf16.msra.mxu0 0
      %1496 = vmatpush.bf16.msra.mxu0 %v1474
      %1497 = vmatmul.bf16.gmra.mxu0 %v1468
      %v1498 = vpop.f32.mrf.mxu0
      %v1499 = vadd.f32 %v1447, %v1498
      %v1500 = vpop.f32.mrf.mxu0
      %1501 = vdwg.mxu0
      %vm1502 = vmpackc.low %vm214, %vm213
      %v1503 = vsel %vm1502, 65537, 0
      %1504 = vrot.lane.b32.xlu0 %v1503, 113
      %v1505 = vpop.permute.xlu0 %1504
      %v1506 = vrot.slane %v1505, 4
      %vm1507 = vcmask 924672
      %v1508 = vsel %vm1507, %v1506, %v1505
      %v1509 = vunpack.c.l.b16 %v1508
      %v1510 = vunpack.c.h.b16 %v1508
      %v1511 = vunpack.c.l.b16 0
      %v1512 = vunpack.c.h.b16 0
      %vm1513 = vcmp.ne.s32.totalorder %v1509, %v1511
      %vm1514 = vcmp.ne.s32.totalorder %v1510, %v1512
      %vm1515 = vmpackc.low %vm1514, %vm1513
      %v1516 = vunpack.c.l.b16 %v1506
      %v1517 = vunpack.c.h.b16 %v1506
      %v1518 = vunpack.c.l.b16 0
      %v1519 = vunpack.c.h.b16 0
      %vm1520 = vcmp.ne.s32.totalorder %v1516, %v1518
      %vm1521 = vcmp.ne.s32.totalorder %v1517, %v1519
      %vm1522 = vmpackc.low %vm1521, %vm1520
      %v1523 = vsel %vm1515, %v1371, 0
      %v1524 = vsel %vm1522, %v1372, 0
      %v1527 = vunpack.c.l.b16 %v1523
      %v1528 = vunpack.c.h.b16 %v1523
      %v1529 = vunpack.c.l.b16 %v1524
      %v1530 = vpack.c.b16 %v1527, %v1527
      %v1531 = vpack.c.b16 %v1528, %v1528
      %v1532 = vpack.c.b16 %v1529, %v1529
      %1533 = vrot.lane.b32.xlu0 %v1530, 15
      %v1534 = vpop.permute.xlu0 %1533
      %1535 = vrot.lane.b32.xlu0 %v1531, 15
      %v1536 = vpop.permute.xlu0 %1535
      %1537 = vrot.lane.b32.xlu0 %v1532, 15
      %v1538 = vpop.permute.xlu0 %1537
      %vm1539 = vcmask 121856
      %v1540 = vsel %vm1539, %v1534, %v1536
      %v1541 = vsel %vm1539, %v1536, %v1538
      %v1543 = vsel %vm1413, %v1362, 0
      %v1546 = vsel %vm1417, %v1540, 0
      %v1549 = vsel %vm1417, %v1541, 0
      %1551 = vmatpush.bf16.msra.mxu0 0
      %1552 = vmatpush.bf16.msra.mxu0 0
      %1553 = vmatpush.bf16.msra.mxu0 0
      %1554 = vmatpush.bf16.msra.mxu0 0
      %1555 = vmatpush.bf16.msra.mxu0 0
      %1556 = vmatpush.bf16.msra.mxu0 0
      %1557 = vmatpush.bf16.msra.mxu0 0
      %1558 = vmatpush.bf16.msra.mxu0 %v1546
      %1559 = vmatmul.bf16.gmra.mxu0 %v1543
      %v1560 = vpop.f32.mrf.mxu0
      %v1561 = vadd.f32 0.0, %v1560
      %v1562 = vpop.f32.mrf.mxu0
      %1563 = vdwg.mxu0
      %1564 = vmatpush.bf16.msra.mxu0 0
      %1565 = vmatpush.bf16.msra.mxu0 0
      %1566 = vmatpush.bf16.msra.mxu0 0
      %1567 = vmatpush.bf16.msra.mxu0 0
      %1568 = vmatpush.bf16.msra.mxu0 0
      %1569 = vmatpush.bf16.msra.mxu0 0
      %1570 = vmatpush.bf16.msra.mxu0 0
      %1571 = vmatpush.bf16.msra.mxu0 %v1549
      %1572 = vmatmul.bf16.gmra.mxu0 %v1543
      %v1573 = vpop.f32.mrf.mxu0
      %v1574 = vadd.f32 0.0, %v1573
      %v1575 = vpop.f32.mrf.mxu0
      %1576 = vdwg.mxu0
      %v1577 = vadd.f32 %v1486, %v1561
      %v1578 = vadd.f32 %v1499, %v1574
      %1579 = vrot.lane.b32.xlu0 %v1374, 127
      %v1580 = vpop.permute.xlu0 %1579
      %v1581 = vrot.slane %v1580, 4
      %vm1582 = vcmask 1039360
      %v1583 = vsel %vm1582, %v1581, %v1580
      %v1584 = vunpack.c.l.b16 %v1583
      %v1585 = vunpack.c.h.b16 %v1583
      %v1586 = vunpack.c.l.b16 0
      %v1587 = vunpack.c.h.b16 0
      %vm1588 = vcmp.ne.s32.totalorder %v1584, %v1586
      %vm1589 = vcmp.ne.s32.totalorder %v1585, %v1587
      %vm1590 = vmpackc.low %vm1589, %vm1588
      %v1591 = vunpack.c.l.b16 %v1581
      %v1592 = vunpack.c.h.b16 %v1581
      %v1593 = vunpack.c.l.b16 0
      %v1594 = vunpack.c.h.b16 0
      %vm1595 = vcmp.ne.s32.totalorder %v1591, %v1593
      %vm1596 = vcmp.ne.s32.totalorder %v1592, %v1594
      %vm1597 = vmpackc.low %vm1596, %vm1595
      %v1598 = vsel %vm1590, %v1371, 0
      %v1599 = vsel %vm1597, %v1372, 0
      %v1602 = vunpack.c.l.b16 %v1598
      %v1603 = vunpack.c.h.b16 %v1598
      %v1604 = vunpack.c.l.b16 %v1599
      %v1605 = vpack.c.b16 %v1602, %v1602
      %v1606 = vpack.c.b16 %v1603, %v1603
      %v1607 = vpack.c.b16 %v1604, %v1604
      %1608 = vrot.lane.b32.xlu0 %v1605, 1
      %v1609 = vpop.permute.xlu0 %1608
      %1610 = vrot.lane.b32.xlu0 %v1606, 1
      %v1611 = vpop.permute.xlu0 %1610
      %1612 = vrot.lane.b32.xlu0 %v1607, 1
      %v1613 = vpop.permute.xlu0 %1612
      %vm1614 = vcmask 7168
      %v1615 = vsel %vm1614, %v1609, %v1611
      %v1616 = vsel %vm1614, %v1611, %v1613
      %v1618 = vsel %vm1413, %v1363, 0
      %v1621 = vsel %vm1417, %v1615, 0
      %v1624 = vsel %vm1417, %v1616, 0
      %1626 = vmatpush.bf16.msra.mxu0 0
      %1627 = vmatpush.bf16.msra.mxu0 0
      %1628 = vmatpush.bf16.msra.mxu0 0
      %1629 = vmatpush.bf16.msra.mxu0 0
      %1630 = vmatpush.bf16.msra.mxu0 0
      %1631 = vmatpush.bf16.msra.mxu0 0
      %1632 = vmatpush.bf16.msra.mxu0 0
      %1633 = vmatpush.bf16.msra.mxu0 %v1621
      %1634 = vmatmul.bf16.gmra.mxu0 %v1618
      %v1635 = vpop.f32.mrf.mxu0
      %v1636 = vadd.f32 0.0, %v1635
      %v1637 = vpop.f32.mrf.mxu0
      %1638 = vdwg.mxu0
      %1639 = vmatpush.bf16.msra.mxu0 0
      %1640 = vmatpush.bf16.msra.mxu0 0
      %1641 = vmatpush.bf16.msra.mxu0 0
      %1642 = vmatpush.bf16.msra.mxu0 0
      %1643 = vmatpush.bf16.msra.mxu0 0
      %1644 = vmatpush.bf16.msra.mxu0 0
      %1645 = vmatpush.bf16.msra.mxu0 0
      %1646 = vmatpush.bf16.msra.mxu0 %v1624
      %1647 = vmatmul.bf16.gmra.mxu0 %v1618
      %v1648 = vpop.f32.mrf.mxu0
      %v1649 = vadd.f32 0.0, %v1648
      %v1650 = vpop.f32.mrf.mxu0
      %1651 = vdwg.mxu0
      %v1652 = vadd.f32 %v1577, %v1636
      %v1653 = vadd.f32 %v1578, %v1649
      %v1654 = vld [vmem:[#allocation2 + $0x4] sm:$0xff]
      %v1656 = vunpack.c.l.b16 %v1654
      %v1657 = vunpack.c.h.b16 %v1654
      %v1658 = vpack.c.b16 %v1656, %v1656
      %v1659 = vpack.c.b16 %v1657, %v1657
      %v1661 = vsel %vm1413, %v1364, 0
      %v1664 = vsel %vm1417, %v1658, 0
      %v1667 = vsel %vm1417, %v1659, 0
      %1669 = vmatpush.bf16.msra.mxu0 0
      %1670 = vmatpush.bf16.msra.mxu0 0
      %1671 = vmatpush.bf16.msra.mxu0 0
      %1672 = vmatpush.bf16.msra.mxu0 0
      %1673 = vmatpush.bf16.msra.mxu0 0
      %1674 = vmatpush.bf16.msra.mxu0 0
      %1675 = vmatpush.bf16.msra.mxu0 0
      %1676 = vmatpush.bf16.msra.mxu0 %v1664
      %1677 = vmatmul.bf16.gmra.mxu0 %v1661
      %v1678 = vpop.f32.mrf.mxu0
      %v1679 = vadd.f32 0.0, %v1678
      %v1680 = vpop.f32.mrf.mxu0
      %1681 = vdwg.mxu0
      %1682 = vmatpush.bf16.msra.mxu0 0
      %1683 = vmatpush.bf16.msra.mxu0 0
      %1684 = vmatpush.bf16.msra.mxu0 0
      %1685 = vmatpush.bf16.msra.mxu0 0
      %1686 = vmatpush.bf16.msra.mxu0 0
      %1687 = vmatpush.bf16.msra.mxu0 0
      %1688 = vmatpush.bf16.msra.mxu0 0
      %1689 = vmatpush.bf16.msra.mxu0 %v1667
      %1690 = vmatmul.bf16.gmra.mxu0 %v1661
      %v1691 = vpop.f32.mrf.mxu0
      %v1692 = vadd.f32 0.0, %v1691
      %v1693 = vpop.f32.mrf.mxu0
      %1694 = vdwg.mxu0
      %v1695 = vadd.f32 %v1652, %v1679
      %v1696 = vadd.f32 %v1653, %v1692
      %v1697 = vld [vmem:[#allocation2 + $0x4] sm:$0xff]
      %v1698 = vld [vmem:[#allocation2 + $0xc] sm:$0xf]
      %1699 = vrot.lane.b32.xlu0 %v1503, 1
      %v1700 = vpop.permute.xlu0 %1699
      %v1701 = vrot.slane %v1700, 4
      %v1702 = vsel %vm1614, %v1701, %v1700
      %v1703 = vunpack.c.l.b16 %v1702
      %v1704 = vunpack.c.h.b16 %v1702
      %v1705 = vunpack.c.l.b16 0
      %v1706 = vunpack.c.h.b16 0
      %vm1707 = vcmp.ne.s32.totalorder %v1703, %v1705
      %vm1708 = vcmp.ne.s32.totalorder %v1704, %v1706
      %vm1709 = vmpackc.low %vm1708, %vm1707
      %v1710 = vunpack.c.l.b16 %v1701
      %v1711 = vunpack.c.h.b16 %v1701
      %v1712 = vunpack.c.l.b16 0
      %v1713 = vunpack.c.h.b16 0
      %vm1714 = vcmp.ne.s32.totalorder %v1710, %v1712
      %vm1715 = vcmp.ne.s32.totalorder %v1711, %v1713
      %vm1716 = vmpackc.low %vm1715, %vm1714
      %v1717 = vsel %vm1709, %v1697, 0
      %v1718 = vsel %vm1716, %v1698, 0
      %v1721 = vunpack.c.l.b16 %v1717
      %v1722 = vunpack.c.h.b16 %v1717
      %v1723 = vunpack.c.l.b16 %v1718
      %v1724 = vpack.c.b16 %v1721, %v1721
      %v1725 = vpack.c.b16 %v1722, %v1722
      %v1726 = vpack.c.b16 %v1723, %v1723
      %1727 = vrot.lane.b32.xlu0 %v1724, 127
      %v1728 = vpop.permute.xlu0 %1727
      %1729 = vrot.lane.b32.xlu0 %v1725, 127
      %v1730 = vpop.permute.xlu0 %1729
      %1731 = vrot.lane.b32.xlu0 %v1726, 127
      %v1732 = vpop.permute.xlu0 %1731
      %v1733 = vsel %vm1582, %v1728, %v1730
      %v1734 = vsel %vm1582, %v1730, %v1732
      %v1736 = vsel %vm1413, %v1365, 0
      %v1739 = vsel %vm1417, %v1733, 0
      %v1742 = vsel %vm1417, %v1734, 0
      %1744 = vmatpush.bf16.msra.mxu0 0
      %1745 = vmatpush.bf16.msra.mxu0 0
      %1746 = vmatpush.bf16.msra.mxu0 0
      %1747 = vmatpush.bf16.msra.mxu0 0
      %1748 = vmatpush.bf16.msra.mxu0 0
      %1749 = vmatpush.bf16.msra.mxu0 0
      %1750 = vmatpush.bf16.msra.mxu0 0
      %1751 = vmatpush.bf16.msra.mxu0 %v1739
      %1752 = vmatmul.bf16.gmra.mxu0 %v1736
      %v1753 = vpop.f32.mrf.mxu0
      %v1754 = vadd.f32 0.0, %v1753
      %v1755 = vpop.f32.mrf.mxu0
      %1756 = vdwg.mxu0
      %1757 = vmatpush.bf16.msra.mxu0 0
      %1758 = vmatpush.bf16.msra.mxu0 0
      %1759 = vmatpush.bf16.msra.mxu0 0
      %1760 = vmatpush.bf16.msra.mxu0 0
      %1761 = vmatpush.bf16.msra.mxu0 0
      %1762 = vmatpush.bf16.msra.mxu0 0
      %1763 = vmatpush.bf16.msra.mxu0 0
      %1764 = vmatpush.bf16.msra.mxu0 %v1742
      %1765 = vmatmul.bf16.gmra.mxu0 %v1736
      %v1766 = vpop.f32.mrf.mxu0
      %v1767 = vadd.f32 0.0, %v1766
      %v1768 = vpop.f32.mrf.mxu0
      %1769 = vdwg.mxu0
      %v1770 = vadd.f32 %v1695, %v1754
      %v1771 = vadd.f32 %v1696, %v1767
      %1772 = vrot.lane.b32.xlu0 %v1374, 15
      %v1773 = vpop.permute.xlu0 %1772
      %v1774 = vrot.slane %v1773, 4
      %v1775 = vsel %vm1539, %v1774, %v1773
      %v1776 = vunpack.c.l.b16 %v1775
      %v1777 = vunpack.c.h.b16 %v1775
      %v1778 = vunpack.c.l.b16 0
      %v1779 = vunpack.c.h.b16 0
      %vm1780 = vcmp.ne.s32.totalorder %v1776, %v1778
      %vm1781 = vcmp.ne.s32.totalorder %v1777, %v1779
      %vm1782 = vmpackc.low %vm1781, %vm1780
      %v1783 = vunpack.c.l.b16 %v1774
      %v1784 = vunpack.c.h.b16 %v1774
      %v1785 = vunpack.c.l.b16 0
      %v1786 = vunpack.c.h.b16 0
      %vm1787 = vcmp.ne.s32.totalorder %v1783, %v1785
      %vm1788 = vcmp.ne.s32.totalorder %v1784, %v1786
      %vm1789 = vmpackc.low %vm1788, %vm1787
      %v1790 = vsel %vm1782, %v1697, 0
      %v1791 = vsel %vm1789, %v1698, 0
      %v1794 = vunpack.c.l.b16 %v1790
      %v1795 = vunpack.c.h.b16 %v1790
      %v1796 = vunpack.c.l.b16 %v1791
      %v1797 = vpack.c.b16 %v1794, %v1794
      %v1798 = vpack.c.b16 %v1795, %v1795
      %v1799 = vpack.c.b16 %v1796, %v1796
      %1800 = vrot.lane.b32.xlu0 %v1797, 113
      %v1801 = vpop.permute.xlu0 %1800
      %1802 = vrot.lane.b32.xlu0 %v1798, 113
      %v1803 = vpop.permute.xlu0 %1802
      %1804 = vrot.lane.b32.xlu0 %v1799, 113
      %v1805 = vpop.permute.xlu0 %1804
      %v1806 = vsel %vm1507, %v1801, %v1803
      %v1807 = vsel %vm1507, %v1803, %v1805
      %v1809 = vsel %vm1413, %v1366, 0
      %v1812 = vsel %vm1417, %v1806, 0
      %v1815 = vsel %vm1417, %v1807, 0
      %1817 = vmatpush.bf16.msra.mxu0 0
      %1818 = vmatpush.bf16.msra.mxu0 0
      %1819 = vmatpush.bf16.msra.mxu0 0
      %1820 = vmatpush.bf16.msra.mxu0 0
      %1821 = vmatpush.bf16.msra.mxu0 0
      %1822 = vmatpush.bf16.msra.mxu0 0
      %1823 = vmatpush.bf16.msra.mxu0 0
      %1824 = vmatpush.bf16.msra.mxu0 %v1812
      %1825 = vmatmul.bf16.gmra.mxu0 %v1809
      %v1826 = vpop.f32.mrf.mxu0
      %v1827 = vadd.f32 0.0, %v1826
      %v1828 = vpop.f32.mrf.mxu0
      %1829 = vdwg.mxu0
      %1830 = vmatpush.bf16.msra.mxu0 0
      %1831 = vmatpush.bf16.msra.mxu0 0
      %1832 = vmatpush.bf16.msra.mxu0 0
      %1833 = vmatpush.bf16.msra.mxu0 0
      %1834 = vmatpush.bf16.msra.mxu0 0
      %1835 = vmatpush.bf16.msra.mxu0 0
      %1836 = vmatpush.bf16.msra.mxu0 0
      %1837 = vmatpush.bf16.msra.mxu0 %v1815
      %1838 = vmatmul.bf16.gmra.mxu0 %v1809
      %v1839 = vpop.f32.mrf.mxu0
      %v1840 = vadd.f32 0.0, %v1839
      %v1841 = vpop.f32.mrf.mxu0
      %1842 = vdwg.mxu0
      %v1843 = vadd.f32 %v1770, %v1827
      %v1844 = vadd.f32 %v1771, %v1840
      %v1847 = vunpack.c.l.b16 %v1697
      %v1848 = vunpack.c.h.b16 %v1697
      %v1849 = vunpack.c.l.b16 %v1698
      %v1850 = vpack.c.b16 %v1847, %v1847
      %v1851 = vpack.c.b16 %v1848, %v1848
      %v1852 = vpack.c.b16 %v1849, %v1849
      %1853 = vrot.lane.b32.xlu0 %v1850, 112
      %v1854 = vpop.permute.xlu0 %1853
      %1855 = vrot.lane.b32.xlu0 %v1851, 112
      %v1856 = vpop.permute.xlu0 %1855
      %1857 = vrot.lane.b32.xlu0 %v1852, 112
      %v1858 = vpop.permute.xlu0 %1857
      %vm1859 = vcmask 916480
      %v1860 = vsel %vm1859, %v1854, %v1856
      %v1861 = vsel %vm1859, %v1856, %v1858
      %v1863 = vsel %vm1413, %v1367, 0
      %v1866 = vsel %vm1417, %v1860, 0
      %v1869 = vsel %vm1417, %v1861, 0
      %1871 = vmatpush.bf16.msra.mxu0 0
      %1872 = vmatpush.bf16.msra.mxu0 0
      %1873 = vmatpush.bf16.msra.mxu0 0
      %1874 = vmatpush.bf16.msra.mxu0 0
      %1875 = vmatpush.bf16.msra.mxu0 0
      %1876 = vmatpush.bf16.msra.mxu0 0
      %1877 = vmatpush.bf16.msra.mxu0 0
      %1878 = vmatpush.bf16.msra.mxu0 %v1866
      %1879 = vmatmul.bf16.gmra.mxu0 %v1863
      %v1880 = vpop.f32.mrf.mxu0
      %v1881 = vadd.f32 0.0, %v1880
      %v1882 = vpop.f32.mrf.mxu0
      %1883 = vdwg.mxu0
      %1884 = vmatpush.bf16.msra.mxu0 0
      %1885 = vmatpush.bf16.msra.mxu0 0
      %1886 = vmatpush.bf16.msra.mxu0 0
      %1887 = vmatpush.bf16.msra.mxu0 0
      %1888 = vmatpush.bf16.msra.mxu0 0
      %1889 = vmatpush.bf16.msra.mxu0 0
      %1890 = vmatpush.bf16.msra.mxu0 0
      %1891 = vmatpush.bf16.msra.mxu0 %v1869
      %1892 = vmatmul.bf16.gmra.mxu0 %v1863
      %v1893 = vpop.f32.mrf.mxu0
      %v1894 = vadd.f32 0.0, %v1893
      %v1895 = vpop.f32.mrf.mxu0
      %1896 = vdwg.mxu0
      %v1897 = vadd.f32 %v1843, %v1881
      %v1898 = vadd.f32 %v1844, %v1894
      %1899 = vrot.lane.b32.xlu0 %v1503, 17
      %v1900 = vpop.permute.xlu0 %1899
      %v1901 = vrot.slane %v1900, 4
      %v1902 = vsel %vm1464, %v1901, %v1900
      %v1903 = vunpack.c.l.b16 %v1902
      %v1904 = vunpack.c.h.b16 %v1902
      %v1905 = vunpack.c.l.b16 0
      %v1906 = vunpack.c.h.b16 0
      %vm1907 = vcmp.ne.s32.totalorder %v1903, %v1905
      %vm1908 = vcmp.ne.s32.totalorder %v1904, %v1906
      %vm1909 = vmpackc.low %vm1908, %vm1907
      %v1910 = vunpack.c.l.b16 %v1901
      %v1911 = vunpack.c.h.b16 %v1901
      %v1912 = vunpack.c.l.b16 0
      %v1913 = vunpack.c.h.b16 0
      %vm1914 = vcmp.ne.s32.totalorder %v1910, %v1912
      %vm1915 = vcmp.ne.s32.totalorder %v1911, %v1913
      %vm1916 = vmpackc.low %vm1915, %vm1914
      %v1917 = vsel %vm1909, %v1697, 0
      %v1918 = vsel %vm1916, %v1698, 0
      %v1921 = vunpack.c.l.b16 %v1917
      %v1922 = vunpack.c.h.b16 %v1917
      %v1923 = vunpack.c.l.b16 %v1918
      %v1924 = vpack.c.b16 %v1921, %v1921
      %v1925 = vpack.c.b16 %v1922, %v1922
      %v1926 = vpack.c.b16 %v1923, %v1923
      %1927 = vrot.lane.b32.xlu0 %v1924, 111
      %v1928 = vpop.permute.xlu0 %1927
      %1929 = vrot.lane.b32.xlu0 %v1925, 111
      %v1930 = vpop.permute.xlu0 %1929
      %1931 = vrot.lane.b32.xlu0 %v1926, 111
      %v1932 = vpop.permute.xlu0 %1931
      %v1933 = vsel %vm1378, %v1928, %v1930
      %v1934 = vsel %vm1378, %v1930, %v1932
      %v1936 = vsel %vm1413, %v1368, 0
      %v1939 = vsel %vm1417, %v1933, 0
      %v1942 = vsel %vm1417, %v1934, 0
      %1944 = vmatpush.bf16.msra.mxu0 0
      %1945 = vmatpush.bf16.msra.mxu0 0
      %1946 = vmatpush.bf16.msra.mxu0 0
      %1947 = vmatpush.bf16.msra.mxu0 0
      %1948 = vmatpush.bf16.msra.mxu0 0
      %1949 = vmatpush.bf16.msra.mxu0 0
      %1950 = vmatpush.bf16.msra.mxu0 0
      %1951 = vmatpush.bf16.msra.mxu0 %v1939
      %1952 = vmatmul.bf16.gmra.mxu0 %v1936
      %v1953 = vpop.f32.mrf.mxu0
      %v1954 = vadd.f32 0.0, %v1953
      %v1955 = vpop.f32.mrf.mxu0
      %1956 = vdwg.mxu0
      %1957 = vmatpush.bf16.msra.mxu0 0
      %1958 = vmatpush.bf16.msra.mxu0 0
      %1959 = vmatpush.bf16.msra.mxu0 0
      %1960 = vmatpush.bf16.msra.mxu0 0
      %1961 = vmatpush.bf16.msra.mxu0 0
      %1962 = vmatpush.bf16.msra.mxu0 0
      %1963 = vmatpush.bf16.msra.mxu0 0
      %1964 = vmatpush.bf16.msra.mxu0 %v1942
      %1965 = vmatmul.bf16.gmra.mxu0 %v1936
      %v1966 = vpop.f32.mrf.mxu0
      %v1967 = vadd.f32 0.0, %v1966
      %v1968 = vpop.f32.mrf.mxu0
      %1969 = vdwg.mxu0
      %v1970 = vadd.f32 %v1897, %v1954
      %v1971 = vadd.f32 %v1898, %v1967
      %1973 = vset.pattern.permute.xlu0 0
      %1974 = vperm.xlu0 %1973, %v1370
      %v1975 = vpop.permute.xlu0 %1974
      %v1977 = vadd.f32 %v1970, %v1975
      %v1978 = vadd.f32 %v1971, %v1975
      %v1979 = vld [vmem:[%s165] sm:$0xff]
      %v1980 = vld [vmem:[%s165 + $0x8] sm:$0xff]
      %v1981 = vadd.f32 %v1977, %v1979
      %v1982 = vadd.f32 %v1978, %v1980
      %1983 = vst [vmem:[%s170] sm:$0xff] %v1981
      %1984 = vst [vmem:[%s170 + $0x8] sm:$0xff] %v1982
      %p1985 = scmp.lt.s32.totalorder %s14, 1
      %s1986 = scalar_select %p1985, %s14, 1
      %s1987 = smul.addr %s1986, 2
      %s1988 = smul.addr %s1987, 8
      %s1989 = scalar_lea.vmem %s3, %s1988
      // Predicated region
      $region40: #{residual_group_forward.1} parent=31 // pred_check
        %p1990 = pneg %p100
      $region41: #{residual_group_forward.1} parent=31 // pred_check_branch
        %1992 = sbr.rel (%p1990) target = $region43
      $region42: #{residual_group_forward.1} parent=31 // pred_region
        _
      $region43: #{residual_group_forward.1} parent=31 // pred_fallthru
        _
    $region32: #{residual_group_forward.1} parent=5 // pred_fallthru
      _
    %p1993 = scmp.le.s32.totalorder 2, %s9
    // Predicated region
    $region44: #{residual_group_forward.1} parent=5 // pred_check
      %p1994 = pneg %p1993
    $region45: #{residual_group_forward.1} parent=5 // pred_check_branch
      %1996 = sbr.rel (%p1994) target = $region47
    $region46: #{residual_group_forward.1} parent=5 // pred_region
      %s1997 = ssub.s32 %s9, 2
      // Predicated region
      $region48: #{residual_group_forward.1} parent=46 // pred_check
        %p1998 = pneg %p106
      $region49: #{residual_group_forward.1} parent=46 // pred_check_branch
        %2000 = sbr.rel (%p1998) target = $region51
      $region50: #{residual_group_forward.1} parent=46 // pred_region
        %p2001 = scmp.lt.s32.totalorder %s15, 1
        %s2002 = scalar_select %p2001, %s15, 1
        %s2003 = smul.addr %s2002, 2
        %s2004 = smul.addr %s2003, 8
        %s2005 = scalar_lea.vmem %s3, %s2004
      $region51: #{residual_group_forward.1} parent=46 // pred_fallthru
        _
    $region47: #{residual_group_forward.1} parent=5 // pred_fallthru
      _
  $region6: #{residual_group_forward.1} parent=0 // loop_footer
    %s13 = sadd.s32 1, %s9
  $region7: #{residual_group_forward.1} parent=0 // loop_footer_branch
    %8 = sbr.rel target = $region3
  $region8: #{residual_group_forward.1} parent=0 // loop_exit
    _

</llo_original>
